<compile_context>
chip_gen: v5e
topology: v5e:2x2
jax: 0.10.0
libtpu: 0.0.40
codegen_flags: <defaults>
</compile_context>

<pallas_src>
from functools import partial

import jax
import jax.numpy as jnp
from jax import lax
from jax.experimental import pallas as pl
from jax.experimental.pallas import tpu as pltpu


# ----------------------------------------------------------------------------
# Pallas kernel: serial recurrence of one LSTM layer, one direction per grid
# step (grid=(2,): 0 = forward, 1 = backward).
# ----------------------------------------------------------------------------
def _bilstm_recurrence_kernel(gx_ref, whh_ref, h0_ref, c0_ref,
                              y_ref, hT_ref, cT_ref,
                              *, hidden, seq_len, unroll):
    """gx:(T,B,4H) precomputed x@W_ih + b  |  whh:(H,4H)  |  h0/c0:(B,H)
    y:(T,B,H) hidden states at ORIGINAL time index  |  hT/cT:(B,H) final states.
    Gate order matches PyTorch: i, f, g, o."""
    H = hidden
    T = seq_len
    d = pl.program_id(0)          # direction: 0 forward, 1 backward

    # Running state lives directly in the output VMEM blocks.
    hT_ref[...] = h0_ref[...]
    cT_ref[...] = c0_ref[...]

    whh = whh_ref[...]            # hoisted: resident across the time loop

    def step(s, carry):
        # forward: t = s ; backward: t = T-1-s  (scalar-unit arithmetic only)
        t = s + d * (T - 1 - 2 * s)
        gates = gx_ref[t] + jnp.dot(hT_ref[...], whh,
                                    preferred_element_type=jnp.float32)
        i_g = jax.nn.sigmoid(gates[:, 0 * H:1 * H])
        f_g = jax.nn.sigmoid(gates[:, 1 * H:2 * H])
        g_g = jnp.tanh(gates[:, 2 * H:3 * H])
        o_g = jax.nn.sigmoid(gates[:, 3 * H:4 * H])

        c_new = f_g * cT_ref[...] + i_g * g_g
        h_new = o_g * jnp.tanh(c_new)

        cT_ref[...] = c_new
        hT_ref[...] = h_new
        y_ref[t] = h_new.astype(y_ref.dtype)
        return carry

    lax.fori_loop(0, T, step, 0, unroll=unroll)


# ----------------------------------------------------------------------------
# One bidirectional layer = hoisted projection (XLA) + one fused pallas_call.
# ----------------------------------------------------------------------------
def _bilstm_layer(x, wih_stack, whh_stack, b_stack, h0, c0):
    """x:(T,B,I)  wih:(2,I,4H)  whh:(2,H,4H)  b:(2,4H)  h0/c0:(2,B,H)
    returns y:(2,T,B,H), hT:(2,B,H), cT:(2,B,H)."""
    T, B, _ = x.shape
    H = h0.shape[-1]

    # Hoisted, non-sequential input projection for BOTH directions as one big
    # matmul; bias folded in so the per-step kernel body has no bias add.
    gx = jnp.einsum("tbi,dio->dtbo", x, wih_stack,
                    preferred_element_type=jnp.float32)
    gx = gx + b_stack[:, None, None, :]

    # VMEM budget: double-buffered blocks + slack, capped so it stays portable
    # to v7x's 64 MiB VMEM.
    per_step_bytes = 4 * (T * B * 4 * H + H * 4 * H + 4 * B * H + T * B * H)
    vmem_bytes = int(min(64 * 1024 * 1024,
                         max(16 * 1024 * 1024, 3 * per_step_bytes)))

    cost = pl.CostEstimate(
        flops=int(2 * (2 * T * B * H * 4 * H)),        # recurrence matmuls (both dirs)
        transcendentals=int(2 * 5 * T * B * H),
        bytes_accessed=int(4 * (gx.size + whh_stack.size
                                + 2 * h0.size + 2 * c0.size + 2 * T * B * H)),
    )

    unroll = True if T <= 32 else 8

    y, hT, cT = pl.pallas_call(
        partial(_bilstm_recurrence_kernel, hidden=H, seq_len=T, unroll=unroll),
        grid=(2,),                                     # direction axis
        out_shape=(
            jax.ShapeDtypeStruct((2, T, B, H), jnp.float32),
            jax.ShapeDtypeStruct((2, B, H), jnp.float32),
            jax.ShapeDtypeStruct((2, B, H), jnp.float32),
        ),
        in_specs=[
            pl.BlockSpec((None, T, B, 4 * H), lambda d: (d, 0, 0, 0)),   # gx
            pl.BlockSpec((None, H, 4 * H), lambda d: (d, 0, 0)),         # W_hh
            pl.BlockSpec((None, B, H), lambda d: (d, 0, 0)),             # h0
            pl.BlockSpec((None, B, H), lambda d: (d, 0, 0)),             # c0
        ],
        out_specs=(
            pl.BlockSpec((None, T, B, H), lambda d: (d, 0, 0, 0)),       # y
            pl.BlockSpec((None, B, H), lambda d: (d, 0, 0)),             # hT
            pl.BlockSpec((None, B, H), lambda d: (d, 0, 0)),             # cT
        ),
        compiler_params=pltpu.CompilerParams(
            dimension_semantics=("parallel",),   # both directions -> both v7x TCs
            vmem_limit_bytes=vmem_bytes,
        ),
        cost_estimate=cost,
    )(gx, whh_stack, h0, c0)
    # TODO(synk): for very long sequences add a time grid axis (h/c carried in
    # scratch across grid steps) so gx/y need not be fully VMEM-resident.
    return y, hT, cT


# ----------------------------------------------------------------------------
# BidirectionalLSTM module equivalent.
# ----------------------------------------------------------------------------
class BidirectionalLSTM:
    def __init__(self, layer_sizes, vector_dim, key):
        self.hidden_size = layer_sizes[0]
        self.vector_dim = vector_dim
        self.num_layers = len(layer_sizes)
        H = self.hidden_size
        k = 1.0 / float(H ** 0.5)

        # PyTorch-style uniform(-1/sqrt(H), 1/sqrt(H)) init; weights stored
        # pre-transposed and stacked over direction so each layer is one call.
        self.params = []
        for layer in range(self.num_layers):
            in_size = vector_dim if layer == 0 else 2 * H
            wih_l, whh_l, b_l = [], [], []
            for _direction in range(2):
                key, k1, k2, k3, k4 = jax.random.split(key, 5)
                w_ih = jax.random.uniform(k1, (4 * H, in_size), jnp.float32, -k, k)
                w_hh = jax.random.uniform(k2, (4 * H, H), jnp.float32, -k, k)
                b_ih = jax.random.uniform(k3, (4 * H,), jnp.float32, -k, k)
                b_hh = jax.random.uniform(k4, (4 * H,), jnp.float32, -k, k)
                wih_l.append(w_ih.T)            # (in_size, 4H)
                whh_l.append(w_hh.T)            # (H, 4H)
                b_l.append(b_ih + b_hh)         # (4H,)
            self.params.append(
                (jnp.stack(wih_l), jnp.stack(whh_l), jnp.stack(b_l)))

    def forward(self, inputs, key, batch_size=1):
        """inputs: (T, batch_size, vector_dim) float32."""
        H = self.hidden_size
        kh, kc = jax.random.split(key)
        # torch.rand(...) initial states -> uniform [0, 1).
        h0 = jax.random.uniform(kh, (self.num_layers * 2, batch_size, H), jnp.float32)
        c0 = jax.random.uniform(kc, (self.num_layers * 2, batch_size, H), jnp.float32)

        x = inputs
        hn_list, cn_list = [], []
        for layer in range(self.num_layers):
            wih, whh, b = self.params[layer]
            y, hT, cT = _bilstm_layer(x, wih, whh, b,
                                      h0[2 * layer:2 * layer + 2],
                                      c0[2 * layer:2 * layer + 2])
            x = jnp.concatenate([y[0], y[1]], axis=-1)   # (T, B, 2H)
            hn_list.append(hT)
            cn_list.append(cT)

        output = x                                       # (T, B, 2H)
        hn = jnp.concatenate(hn_list, axis=0)            # (num_layers*2, B, H)
        cn = jnp.concatenate(cn_list, axis=0)
        return output, hn, cn


# ----------------------------------------------------------------------------
# Pure-JAX reference (lax.scan) of the same math, for a correctness cross-check.
# ----------------------------------------------------------------------------
def _reference_forward(model, inputs, key, batch_size):
    H = model.hidden_size
    kh, kc = jax.random.split(key)
    h0 = jax.random.uniform(kh, (model.num_layers * 2, batch_size, H), jnp.float32)
    c0 = jax.random.uniform(kc, (model.num_layers * 2, batch_size, H), jnp.float32)

    def one_dir(x, wih, whh, b, h, c):
        def step(carry, x_t):
            h, c = carry
            g = x_t @ wih + b + h @ whh
            i = jax.nn.sigmoid(g[:, :H])
            f = jax.nn.sigmoid(g[:, H:2 * H])
            gg = jnp.tanh(g[:, 2 * H:3 * H])
            o = jax.nn.sigmoid(g[:, 3 * H:])
            c = f * c + i * gg
            h = o * jnp.tanh(c)
            return (h, c), h
        (hT, cT), ys = lax.scan(step, (h, c), x)
        return ys, hT, cT

    x = inputs
    hn_list, cn_list = [], []
    for layer in range(model.num_layers):
        wih, whh, b = model.params[layer]
        outs = []
        for d in range(2):
            xi = x if d == 0 else x[::-1]
            ys, hT, cT = one_dir(xi, wih[d], whh[d], b[d],
                                 h0[2 * layer + d], c0[2 * layer + d])
            if d == 1:
                ys = ys[::-1]
            outs.append(ys)
            hn_list.append(hT)
            cn_list.append(cT)
        x = jnp.concatenate(outs, axis=-1)
    return x, jnp.stack(hn_list, 0), jnp.stack(cn_list, 0)


if __name__ == "__main__":
    key = jax.random.PRNGKey(0)
    k_param, k_state, k_in = jax.random.split(key, 3)

    seq_len = 8
    batch = 2
    vector_dim = 32
    layer_sizes = [32, 32]          # hidden=32, num_layers=2, bidirectional

    model = BidirectionalLSTM(layer_sizes, vector_dim, k_param)
    inputs = jax.random.normal(k_in, (seq_len, batch, vector_dim), jnp.float32)

    output, hn, cn = model.forward(inputs, k_state, batch_size=batch)
    jax.block_until_ready((output, hn, cn))

    assert output.shape == (seq_len, batch, 2 * layer_sizes[0])
    assert hn.shape == (len(layer_sizes) * 2, batch, layer_sizes[0])
    assert cn.shape == (len(layer_sizes) * 2, batch, layer_sizes[0])

    # Numerical cross-check against the pure-JAX reference.
    ref_out, ref_hn, ref_cn = _reference_forward(model, inputs, k_state, batch)
    assert jnp.allclose(output, ref_out, atol=5e-3, rtol=5e-3)
    assert jnp.allclose(hn, ref_hn, atol=5e-3, rtol=5e-3)
    assert jnp.allclose(cn, ref_cn, atol=5e-3, rtol=5e-3)

    print("KERNEL_OK")
</pallas_src>

<mosaic_0001>
module attributes {stable_mosaic.version = 11 : i64} {
  func.func @_bilstm_recurrence_kernel(%arg0: i32, %arg1: memref<1x8x2x128xf32, #tpu.memory_space<vmem>>, %arg2: memref<1x32x128xf32, #tpu.memory_space<vmem>>, %arg3: memref<1x2x32xf32, #tpu.memory_space<vmem>>, %arg4: memref<1x2x32xf32, #tpu.memory_space<vmem>>, %arg5: memref<1x8x2x32xf32, #tpu.memory_space<vmem>>, %arg6: memref<1x2x32xf32, #tpu.memory_space<vmem>>, %arg7: memref<1x2x32xf32, #tpu.memory_space<vmem>>) attributes {dimension_semantics = [#tpu.dimension_semantics<parallel>], iteration_bounds = array<i64: 2>, scalar_prefetch = 0 : i64, scratch_operands = 0 : i64, tpu.core_type = #tpu.core_type<tc>, window_params = [{transform_indices = @transform_0, window_bounds = array<i64: 1, 8, 2, 128>}, {transform_indices = @transform_1, window_bounds = array<i64: 1, 32, 128>}, {transform_indices = @transform_2, window_bounds = array<i64: 1, 2, 32>}, {transform_indices = @transform_3, window_bounds = array<i64: 1, 2, 32>}, {transform_indices = @transform_4, window_bounds = array<i64: 1, 8, 2, 32>}, {transform_indices = @transform_5, window_bounds = array<i64: 1, 2, 32>}, {transform_indices = @transform_6, window_bounds = array<i64: 1, 2, 32>}]} {
    %c0 = arith.constant 0 : index
    %c0_0 = arith.constant 0 : index
    %c0_1 = arith.constant 0 : index
    %0 = vector.load %arg3[%c0, %c0_0, %c0_1] : memref<1x2x32xf32, #tpu.memory_space<vmem>>, vector<1x2x32xf32>
    %1 = vector.shape_cast %0 : vector<1x2x32xf32> to vector<2x32xf32>
    %c0_2 = arith.constant 0 : index
    %c0_3 = arith.constant 0 : index
    %c0_4 = arith.constant 0 : index
    %2 = vector.load %arg6[%c0_2, %c0_3, %c0_4] : memref<1x2x32xf32, #tpu.memory_space<vmem>>, vector<1x2x32xf32>
    %3 = vector.shape_cast %2 : vector<1x2x32xf32> to vector<2x32xf32>
    %4 = vector.shape_cast %1 : vector<2x32xf32> to vector<1x2x32xf32>
    tpu.vector_store %arg6[%c0_2, %c0_3, %c0_4], %4 {strides = array<i32>} : memref<1x2x32xf32, #tpu.memory_space<vmem>>, vector<1x2x32xf32>,
    %c0_5 = arith.constant 0 : index
    %c0_6 = arith.constant 0 : index
    %c0_7 = arith.constant 0 : index
    %5 = vector.load %arg4[%c0_5, %c0_6, %c0_7] : memref<1x2x32xf32, #tpu.memory_space<vmem>>, vector<1x2x32xf32>
    %6 = vector.shape_cast %5 : vector<1x2x32xf32> to vector<2x32xf32>
    %c0_8 = arith.constant 0 : index
    %c0_9 = arith.constant 0 : index
    %c0_10 = arith.constant 0 : index
    %7 = vector.load %arg7[%c0_8, %c0_9, %c0_10] : memref<1x2x32xf32, #tpu.memory_space<vmem>>, vector<1x2x32xf32>
    %8 = vector.shape_cast %7 : vector<1x2x32xf32> to vector<2x32xf32>
    %9 = vector.shape_cast %6 : vector<2x32xf32> to vector<1x2x32xf32>
    tpu.vector_store %arg7[%c0_8, %c0_9, %c0_10], %9 {strides = array<i32>} : memref<1x2x32xf32, #tpu.memory_space<vmem>>, vector<1x2x32xf32>,
    %c0_11 = arith.constant 0 : index
    %c0_12 = arith.constant 0 : index
    %c0_13 = arith.constant 0 : index
    %10 = vector.load %arg2[%c0_11, %c0_12, %c0_13] : memref<1x32x128xf32, #tpu.memory_space<vmem>>, vector<1x32x128xf32>
    %11 = vector.shape_cast %10 : vector<1x32x128xf32> to vector<32x128xf32>
    %c0_i32 = arith.constant 0 : i32
    %c2_i32 = arith.constant 2 : i32
    %12 = arith.muli %c2_i32, %c0_i32 : i32
    %c7_i32 = arith.constant 7 : i32
    %13 = arith.subi %c7_i32, %12 : i32
    %14 = arith.muli %arg0, %13 : i32
    %15 = arith.addi %c0_i32, %14 : i32
    %c0_14 = arith.constant 0 : index
    %16 = arith.index_cast %15 : i32 to index
    %c0_15 = arith.constant 0 : index
    %c0_16 = arith.constant 0 : index
    %17 = vector.load %arg1[%c0_14, %16, %c0_15, %c0_16] : memref<1x8x2x128xf32, #tpu.memory_space<vmem>>, vector<1x1x2x128xf32>
    %18 = vector.shape_cast %17 : vector<1x1x2x128xf32> to vector<2x128xf32>
    %c0_17 = arith.constant 0 : index
    %c0_18 = arith.constant 0 : index
    %c0_19 = arith.constant 0 : index
    %19 = vector.load %arg6[%c0_17, %c0_18, %c0_19] : memref<1x2x32xf32, #tpu.memory_space<vmem>>, vector<1x2x32xf32>
    %20 = vector.shape_cast %19 : vector<1x2x32xf32> to vector<2x32xf32>
    %cst = arith.constant dense<0.000000e+00> : vector<2x128xf32>
    %21 = tpu.matmul %20, %11, %cst {dimension_numbers = #tpu.dot_dimension_numbers<[1], [0], [0], [1], [0, 0, 1, 1], [], []>} : vector<2x32xf32>, vector<32x128xf32>, vector<2x128xf32> -> vector<2x128xf32>
    %22 = arith.addf %18, %21 : vector<2x128xf32>
    %23 = vector.extract_strided_slice %22 {offsets = [0, 0], sizes = [2, 32], strides = [1, 1]} : vector<2x128xf32> to vector<2x32xf32>
    %24 = arith.negf %23 : vector<2x32xf32>
    %25 = math.exp %24 : vector<2x32xf32>
    %cst_20 = arith.constant 1.000000e+00 : f32
    %26 = vector.broadcast %cst_20 : f32 to vector<2x32xf32>
    %27 = arith.addf %26, %25 : vector<2x32xf32>
    %28 = arith.divf %26, %27 : vector<2x32xf32>
    %29 = vector.extract_strided_slice %22 {offsets = [0, 32], sizes = [2, 32], strides = [1, 1]} : vector<2x128xf32> to vector<2x32xf32>
    %30 = arith.negf %29 : vector<2x32xf32>
    %31 = math.exp %30 : vector<2x32xf32>
    %cst_21 = arith.constant 1.000000e+00 : f32
    %32 = vector.broadcast %cst_21 : f32 to vector<2x32xf32>
    %33 = arith.addf %32, %31 : vector<2x32xf32>
    %34 = arith.divf %32, %33 : vector<2x32xf32>
    %35 = vector.extract_strided_slice %22 {offsets = [0, 64], sizes = [2, 32], strides = [1, 1]} : vector<2x128xf32> to vector<2x32xf32>
    %36 = math.tanh %35 : vector<2x32xf32>
    %37 = vector.extract_strided_slice %22 {offsets = [0, 96], sizes = [2, 32], strides = [1, 1]} : vector<2x128xf32> to vector<2x32xf32>
    %38 = arith.negf %37 : vector<2x32xf32>
    %39 = math.exp %38 : vector<2x32xf32>
    %cst_22 = arith.constant 1.000000e+00 : f32
    %40 = vector.broadcast %cst_22 : f32 to vector<2x32xf32>
    %41 = arith.addf %40, %39 : vector<2x32xf32>
    %42 = arith.divf %40, %41 : vector<2x32xf32>
    %c0_23 = arith.constant 0 : index
    %c0_24 = arith.constant 0 : index
    %c0_25 = arith.constant 0 : index
    %43 = vector.load %arg7[%c0_23, %c0_24, %c0_25] : memref<1x2x32xf32, #tpu.memory_space<vmem>>, vector<1x2x32xf32>
    %44 = vector.shape_cast %43 : vector<1x2x32xf32> to vector<2x32xf32>
    %45 = arith.mulf %34, %44 : vector<2x32xf32>
    %46 = arith.mulf %28, %36 : vector<2x32xf32>
    %47 = arith.addf %45, %46 : vector<2x32xf32>
    %48 = math.tanh %47 : vector<2x32xf32>
    %49 = arith.mulf %42, %48 : vector<2x32xf32>
    %c0_26 = arith.constant 0 : index
    %c0_27 = arith.constant 0 : index
    %c0_28 = arith.constant 0 : index
    %50 = vector.load %arg7[%c0_26, %c0_27, %c0_28] : memref<1x2x32xf32, #tpu.memory_space<vmem>>, vector<1x2x32xf32>
    %51 = vector.shape_cast %50 : vector<1x2x32xf32> to vector<2x32xf32>
    %52 = vector.shape_cast %47 : vector<2x32xf32> to vector<1x2x32xf32>
    tpu.vector_store %arg7[%c0_26, %c0_27, %c0_28], %52 {strides = array<i32>} : memref<1x2x32xf32, #tpu.memory_space<vmem>>, vector<1x2x32xf32>,
    %c0_29 = arith.constant 0 : index
    %c0_30 = arith.constant 0 : index
    %c0_31 = arith.constant 0 : index
    %53 = vector.load %arg6[%c0_29, %c0_30, %c0_31] : memref<1x2x32xf32, #tpu.memory_space<vmem>>, vector<1x2x32xf32>
    %54 = vector.shape_cast %53 : vector<1x2x32xf32> to vector<2x32xf32>
    %55 = vector.shape_cast %49 : vector<2x32xf32> to vector<1x2x32xf32>
    tpu.vector_store %arg6[%c0_29, %c0_30, %c0_31], %55 {strides = array<i32>} : memref<1x2x32xf32, #tpu.memory_space<vmem>>, vector<1x2x32xf32>,
    %c0_32 = arith.constant 0 : index
    %56 = arith.index_cast %15 : i32 to index
    %c0_33 = arith.constant 0 : index
    %c0_34 = arith.constant 0 : index
    %57 = vector.load %arg5[%c0_32, %56, %c0_33, %c0_34] : memref<1x8x2x32xf32, #tpu.memory_space<vmem>>, vector<1x1x2x32xf32>
    %58 = vector.shape_cast %57 : vector<1x1x2x32xf32> to vector<2x32xf32>
    %59 = vector.shape_cast %49 : vector<2x32xf32> to vector<1x1x2x32xf32>
    tpu.vector_store %arg5[%c0_32, %56, %c0_33, %c0_34], %59 {strides = array<i32>} : memref<1x8x2x32xf32, #tpu.memory_space<vmem>>, vector<1x1x2x32xf32>,
    %c1_i32 = arith.constant 1 : i32
    %c2_i32_35 = arith.constant 2 : i32
    %60 = arith.muli %c2_i32_35, %c1_i32 : i32
    %c7_i32_36 = arith.constant 7 : i32
    %61 = arith.subi %c7_i32_36, %60 : i32
    %62 = arith.muli %arg0, %61 : i32
    %63 = arith.addi %c1_i32, %62 : i32
    %c0_37 = arith.constant 0 : index
    %64 = arith.index_cast %63 : i32 to index
    %c0_38 = arith.constant 0 : index
    %c0_39 = arith.constant 0 : index
    %65 = vector.load %arg1[%c0_37, %64, %c0_38, %c0_39] : memref<1x8x2x128xf32, #tpu.memory_space<vmem>>, vector<1x1x2x128xf32>
    %66 = vector.shape_cast %65 : vector<1x1x2x128xf32> to vector<2x128xf32>
    %c0_40 = arith.constant 0 : index
    %c0_41 = arith.constant 0 : index
    %c0_42 = arith.constant 0 : index
    %67 = vector.load %arg6[%c0_40, %c0_41, %c0_42] : memref<1x2x32xf32, #tpu.memory_space<vmem>>, vector<1x2x32xf32>
    %68 = vector.shape_cast %67 : vector<1x2x32xf32> to vector<2x32xf32>
    %cst_43 = arith.constant dense<0.000000e+00> : vector<2x128xf32>
    %69 = tpu.matmul %68, %11, %cst_43 {dimension_numbers = #tpu.dot_dimension_numbers<[1], [0], [0], [1], [0, 0, 1, 1], [], []>} : vector<2x32xf32>, vector<32x128xf32>, vector<2x128xf32> -> vector<2x128xf32>
    %70 = arith.addf %66, %69 : vector<2x128xf32>
    %71 = vector.extract_strided_slice %70 {offsets = [0, 0], sizes = [2, 32], strides = [1, 1]} : vector<2x128xf32> to vector<2x32xf32>
    %72 = arith.negf %71 : vector<2x32xf32>
    %73 = math.exp %72 : vector<2x32xf32>
    %cst_44 = arith.constant 1.000000e+00 : f32
    %74 = vector.broadcast %cst_44 : f32 to vector<2x32xf32>
    %75 = arith.addf %74, %73 : vector<2x32xf32>
    %76 = arith.divf %74, %75 : vector<2x32xf32>
    %77 = vector.extract_strided_slice %70 {offsets = [0, 32], sizes = [2, 32], strides = [1, 1]} : vector<2x128xf32> to vector<2x32xf32>
    %78 = arith.negf %77 : vector<2x32xf32>
    %79 = math.exp %78 : vector<2x32xf32>
    %cst_45 = arith.constant 1.000000e+00 : f32
    %80 = vector.broadcast %cst_45 : f32 to vector<2x32xf32>
    %81 = arith.addf %80, %79 : vector<2x32xf32>
    %82 = arith.divf %80, %81 : vector<2x32xf32>
    %83 = vector.extract_strided_slice %70 {offsets = [0, 64], sizes = [2, 32], strides = [1, 1]} : vector<2x128xf32> to vector<2x32xf32>
    %84 = math.tanh %83 : vector<2x32xf32>
    %85 = vector.extract_strided_slice %70 {offsets = [0, 96], sizes = [2, 32], strides = [1, 1]} : vector<2x128xf32> to vector<2x32xf32>
    %86 = arith.negf %85 : vector<2x32xf32>
    %87 = math.exp %86 : vector<2x32xf32>
    %cst_46 = arith.constant 1.000000e+00 : f32
    %88 = vector.broadcast %cst_46 : f32 to vector<2x32xf32>
    %89 = arith.addf %88, %87 : vector<2x32xf32>
    %90 = arith.divf %88, %89 : vector<2x32xf32>
    %c0_47 = arith.constant 0 : index
    %c0_48 = arith.constant 0 : index
    %c0_49 = arith.constant 0 : index
    %91 = vector.load %arg7[%c0_47, %c0_48, %c0_49] : memref<1x2x32xf32, #tpu.memory_space<vmem>>, vector<1x2x32xf32>
    %92 = vector.shape_cast %91 : vector<1x2x32xf32> to vector<2x32xf32>
    %93 = arith.mulf %82, %92 : vector<2x32xf32>
    %94 = arith.mulf %76, %84 : vector<2x32xf32>
    %95 = arith.addf %93, %94 : vector<2x32xf32>
    %96 = math.tanh %95 : vector<2x32xf32>
    %97 = arith.mulf %90, %96 : vector<2x32xf32>
    %c0_50 = arith.constant 0 : index
    %c0_51 = arith.constant 0 : index
    %c0_52 = arith.constant 0 : index
    %98 = vector.load %arg7[%c0_50, %c0_51, %c0_52] : memref<1x2x32xf32, #tpu.memory_space<vmem>>, vector<1x2x32xf32>
    %99 = vector.shape_cast %98 : vector<1x2x32xf32> to vector<2x32xf32>
    %100 = vector.shape_cast %95 : vector<2x32xf32> to vector<1x2x32xf32>
    tpu.vector_store %arg7[%c0_50, %c0_51, %c0_52], %100 {strides = array<i32>} : memref<1x2x32xf32, #tpu.memory_space<vmem>>, vector<1x2x32xf32>,
    %c0_53 = arith.constant 0 : index
    %c0_54 = arith.constant 0 : index
    %c0_55 = arith.constant 0 : index
    %101 = vector.load %arg6[%c0_53, %c0_54, %c0_55] : memref<1x2x32xf32, #tpu.memory_space<vmem>>, vector<1x2x32xf32>
    %102 = vector.shape_cast %101 : vector<1x2x32xf32> to vector<2x32xf32>
    %103 = vector.shape_cast %97 : vector<2x32xf32> to vector<1x2x32xf32>
    tpu.vector_store %arg6[%c0_53, %c0_54, %c0_55], %103 {strides = array<i32>} : memref<1x2x32xf32, #tpu.memory_space<vmem>>, vector<1x2x32xf32>,
    %c0_56 = arith.constant 0 : index
    %104 = arith.index_cast %63 : i32 to index
    %c0_57 = arith.constant 0 : index
    %c0_58 = arith.constant 0 : index
    %105 = vector.load %arg5[%c0_56, %104, %c0_57, %c0_58] : memref<1x8x2x32xf32, #tpu.memory_space<vmem>>, vector<1x1x2x32xf32>
    %106 = vector.shape_cast %105 : vector<1x1x2x32xf32> to vector<2x32xf32>
    %107 = vector.shape_cast %97 : vector<2x32xf32> to vector<1x1x2x32xf32>
    tpu.vector_store %arg5[%c0_56, %104, %c0_57, %c0_58], %107 {strides = array<i32>} : memref<1x8x2x32xf32, #tpu.memory_space<vmem>>, vector<1x1x2x32xf32>,
    %c2_i32_59 = arith.constant 2 : i32
    %c2_i32_60 = arith.constant 2 : i32
    %108 = arith.muli %c2_i32_60, %c2_i32_59 : i32
    %c7_i32_61 = arith.constant 7 : i32
    %109 = arith.subi %c7_i32_61, %108 : i32
    %110 = arith.muli %arg0, %109 : i32
    %111 = arith.addi %c2_i32_59, %110 : i32
    %c0_62 = arith.constant 0 : index
    %112 = arith.index_cast %111 : i32 to index
    %c0_63 = arith.constant 0 : index
    %c0_64 = arith.constant 0 : index
    %113 = vector.load %arg1[%c0_62, %112, %c0_63, %c0_64] : memref<1x8x2x128xf32, #tpu.memory_space<vmem>>, vector<1x1x2x128xf32>
    %114 = vector.shape_cast %113 : vector<1x1x2x128xf32> to vector<2x128xf32>
    %c0_65 = arith.constant 0 : index
    %c0_66 = arith.constant 0 : index
    %c0_67 = arith.constant 0 : index
    %115 = vector.load %arg6[%c0_65, %c0_66, %c0_67] : memref<1x2x32xf32, #tpu.memory_space<vmem>>, vector<1x2x32xf32>
    %116 = vector.shape_cast %115 : vector<1x2x32xf32> to vector<2x32xf32>
    %cst_68 = arith.constant dense<0.000000e+00> : vector<2x128xf32>
    %117 = tpu.matmul %116, %11, %cst_68 {dimension_numbers = #tpu.dot_dimension_numbers<[1], [0], [0], [1], [0, 0, 1, 1], [], []>} : vector<2x32xf32>, vector<32x128xf32>, vector<2x128xf32> -> vector<2x128xf32>
    %118 = arith.addf %114, %117 : vector<2x128xf32>
    %119 = vector.extract_strided_slice %118 {offsets = [0, 0], sizes = [2, 32], strides = [1, 1]} : vector<2x128xf32> to vector<2x32xf32>
    %120 = arith.negf %119 : vector<2x32xf32>
    %121 = math.exp %120 : vector<2x32xf32>
    %cst_69 = arith.constant 1.000000e+00 : f32
    %122 = vector.broadcast %cst_69 : f32 to vector<2x32xf32>
    %123 = arith.addf %122, %121 : vector<2x32xf32>
    %124 = arith.divf %122, %123 : vector<2x32xf32>
    %125 = vector.extract_strided_slice %118 {offsets = [0, 32], sizes = [2, 32], strides = [1, 1]} : vector<2x128xf32> to vector<2x32xf32>
    %126 = arith.negf %125 : vector<2x32xf32>
    %127 = math.exp %126 : vector<2x32xf32>
    %cst_70 = arith.constant 1.000000e+00 : f32
    %128 = vector.broadcast %cst_70 : f32 to vector<2x32xf32>
    %129 = arith.addf %128, %127 : vector<2x32xf32>
    %130 = arith.divf %128, %129 : vector<2x32xf32>
    %131 = vector.extract_strided_slice %118 {offsets = [0, 64], sizes = [2, 32], strides = [1, 1]} : vector<2x128xf32> to vector<2x32xf32>
    %132 = math.tanh %131 : vector<2x32xf32>
    %133 = vector.extract_strided_slice %118 {offsets = [0, 96], sizes = [2, 32], strides = [1, 1]} : vector<2x128xf32> to vector<2x32xf32>
    %134 = arith.negf %133 : vector<2x32xf32>
    %135 = math.exp %134 : vector<2x32xf32>
    %cst_71 = arith.constant 1.000000e+00 : f32
    %136 = vector.broadcast %cst_71 : f32 to vector<2x32xf32>
    %137 = arith.addf %136, %135 : vector<2x32xf32>
    %138 = arith.divf %136, %137 : vector<2x32xf32>
    %c0_72 = arith.constant 0 : index
    %c0_73 = arith.constant 0 : index
    %c0_74 = arith.constant 0 : index
    %139 = vector.load %arg7[%c0_72, %c0_73, %c0_74] : memref<1x2x32xf32, #tpu.memory_space<vmem>>, vector<1x2x32xf32>
    %140 = vector.shape_cast %139 : vector<1x2x32xf32> to vector<2x32xf32>
    %141 = arith.mulf %130, %140 : vector<2x32xf32>
    %142 = arith.mulf %124, %132 : vector<2x32xf32>
    %143 = arith.addf %141, %142 : vector<2x32xf32>
    %144 = math.tanh %143 : vector<2x32xf32>
    %145 = arith.mulf %138, %144 : vector<2x32xf32>
    %c0_75 = arith.constant 0 : index
    %c0_76 = arith.constant 0 : index
    %c0_77 = arith.constant 0 : index
    %146 = vector.load %arg7[%c0_75, %c0_76, %c0_77] : memref<1x2x32xf32, #tpu.memory_space<vmem>>, vector<1x2x32xf32>
    %147 = vector.shape_cast %146 : vector<1x2x32xf32> to vector<2x32xf32>
    %148 = vector.shape_cast %143 : vector<2x32xf32> to vector<1x2x32xf32>
    tpu.vector_store %arg7[%c0_75, %c0_76, %c0_77], %148 {strides = array<i32>} : memref<1x2x32xf32, #tpu.memory_space<vmem>>, vector<1x2x32xf32>,
    %c0_78 = arith.constant 0 : index
    %c0_79 = arith.constant 0 : index
    %c0_80 = arith.constant 0 : index
    %149 = vector.load %arg6[%c0_78, %c0_79, %c0_80] : memref<1x2x32xf32, #tpu.memory_space<vmem>>, vector<1x2x32xf32>
    %150 = vector.shape_cast %149 : vector<1x2x32xf32> to vector<2x32xf32>
    %151 = vector.shape_cast %145 : vector<2x32xf32> to vector<1x2x32xf32>
    tpu.vector_store %arg6[%c0_78, %c0_79, %c0_80], %151 {strides = array<i32>} : memref<1x2x32xf32, #tpu.memory_space<vmem>>, vector<1x2x32xf32>,
    %c0_81 = arith.constant 0 : index
    %152 = arith.index_cast %111 : i32 to index
    %c0_82 = arith.constant 0 : index
    %c0_83 = arith.constant 0 : index
    %153 = vector.load %arg5[%c0_81, %152, %c0_82, %c0_83] : memref<1x8x2x32xf32, #tpu.memory_space<vmem>>, vector<1x1x2x32xf32>
    %154 = vector.shape_cast %153 : vector<1x1x2x32xf32> to vector<2x32xf32>
    %155 = vector.shape_cast %145 : vector<2x32xf32> to vector<1x1x2x32xf32>
    tpu.vector_store %arg5[%c0_81, %152, %c0_82, %c0_83], %155 {strides = array<i32>} : memref<1x8x2x32xf32, #tpu.memory_space<vmem>>, vector<1x1x2x32xf32>,
    %c3_i32 = arith.constant 3 : i32
    %c2_i32_84 = arith.constant 2 : i32
    %156 = arith.muli %c2_i32_84, %c3_i32 : i32
    %c7_i32_85 = arith.constant 7 : i32
    %157 = arith.subi %c7_i32_85, %156 : i32
    %158 = arith.muli %arg0, %157 : i32
    %159 = arith.addi %c3_i32, %158 : i32
    %c0_86 = arith.constant 0 : index
    %160 = arith.index_cast %159 : i32 to index
    %c0_87 = arith.constant 0 : index
    %c0_88 = arith.constant 0 : index
    %161 = vector.load %arg1[%c0_86, %160, %c0_87, %c0_88] : memref<1x8x2x128xf32, #tpu.memory_space<vmem>>, vector<1x1x2x128xf32>
    %162 = vector.shape_cast %161 : vector<1x1x2x128xf32> to vector<2x128xf32>
    %c0_89 = arith.constant 0 : index
    %c0_90 = arith.constant 0 : index
    %c0_91 = arith.constant 0 : index
    %163 = vector.load %arg6[%c0_89, %c0_90, %c0_91] : memref<1x2x32xf32, #tpu.memory_space<vmem>>, vector<1x2x32xf32>
    %164 = vector.shape_cast %163 : vector<1x2x32xf32> to vector<2x32xf32>
    %cst_92 = arith.constant dense<0.000000e+00> : vector<2x128xf32>
    %165 = tpu.matmul %164, %11, %cst_92 {dimension_numbers = #tpu.dot_dimension_numbers<[1], [0], [0], [1], [0, 0, 1, 1], [], []>} : vector<2x32xf32>, vector<32x128xf32>, vector<2x128xf32> -> vector<2x128xf32>
    %166 = arith.addf %162, %165 : vector<2x128xf32>
    %167 = vector.extract_strided_slice %166 {offsets = [0, 0], sizes = [2, 32], strides = [1, 1]} : vector<2x128xf32> to vector<2x32xf32>
    %168 = arith.negf %167 : vector<2x32xf32>
    %169 = math.exp %168 : vector<2x32xf32>
    %cst_93 = arith.constant 1.000000e+00 : f32
    %170 = vector.broadcast %cst_93 : f32 to vector<2x32xf32>
    %171 = arith.addf %170, %169 : vector<2x32xf32>
    %172 = arith.divf %170, %171 : vector<2x32xf32>
    %173 = vector.extract_strided_slice %166 {offsets = [0, 32], sizes = [2, 32], strides = [1, 1]} : vector<2x128xf32> to vector<2x32xf32>
    %174 = arith.negf %173 : vector<2x32xf32>
    %175 = math.exp %174 : vector<2x32xf32>
    %cst_94 = arith.constant 1.000000e+00 : f32
    %176 = vector.broadcast %cst_94 : f32 to vector<2x32xf32>
    %177 = arith.addf %176, %175 : vector<2x32xf32>
    %178 = arith.divf %176, %177 : vector<2x32xf32>
    %179 = vector.extract_strided_slice %166 {offsets = [0, 64], sizes = [2, 32], strides = [1, 1]} : vector<2x128xf32> to vector<2x32xf32>
    %180 = math.tanh %179 : vector<2x32xf32>
    %181 = vector.extract_strided_slice %166 {offsets = [0, 96], sizes = [2, 32], strides = [1, 1]} : vector<2x128xf32> to vector<2x32xf32>
    %182 = arith.negf %181 : vector<2x32xf32>
    %183 = math.exp %182 : vector<2x32xf32>
    %cst_95 = arith.constant 1.000000e+00 : f32
    %184 = vector.broadcast %cst_95 : f32 to vector<2x32xf32>
    %185 = arith.addf %184, %183 : vector<2x32xf32>
    %186 = arith.divf %184, %185 : vector<2x32xf32>
    %c0_96 = arith.constant 0 : index
    %c0_97 = arith.constant 0 : index
    %c0_98 = arith.constant 0 : index
    %187 = vector.load %arg7[%c0_96, %c0_97, %c0_98] : memref<1x2x32xf32, #tpu.memory_space<vmem>>, vector<1x2x32xf32>
    %188 = vector.shape_cast %187 : vector<1x2x32xf32> to vector<2x32xf32>
    %189 = arith.mulf %178, %188 : vector<2x32xf32>
    %190 = arith.mulf %172, %180 : vector<2x32xf32>
    %191 = arith.addf %189, %190 : vector<2x32xf32>
    %192 = math.tanh %191 : vector<2x32xf32>
    %193 = arith.mulf %186, %192 : vector<2x32xf32>
    %c0_99 = arith.constant 0 : index
    %c0_100 = arith.constant 0 : index
    %c0_101 = arith.constant 0 : index
    %194 = vector.load %arg7[%c0_99, %c0_100, %c0_101] : memref<1x2x32xf32, #tpu.memory_space<vmem>>, vector<1x2x32xf32>
    %195 = vector.shape_cast %194 : vector<1x2x32xf32> to vector<2x32xf32>
    %196 = vector.shape_cast %191 : vector<2x32xf32> to vector<1x2x32xf32>
    tpu.vector_store %arg7[%c0_99, %c0_100, %c0_101], %196 {strides = array<i32>} : memref<1x2x32xf32, #tpu.memory_space<vmem>>, vector<1x2x32xf32>,
    %c0_102 = arith.constant 0 : index
    %c0_103 = arith.constant 0 : index
    %c0_104 = arith.constant 0 : index
    %197 = vector.load %arg6[%c0_102, %c0_103, %c0_104] : memref<1x2x32xf32, #tpu.memory_space<vmem>>, vector<1x2x32xf32>
    %198 = vector.shape_cast %197 : vector<1x2x32xf32> to vector<2x32xf32>
    %199 = vector.shape_cast %193 : vector<2x32xf32> to vector<1x2x32xf32>
    tpu.vector_store %arg6[%c0_102, %c0_103, %c0_104], %199 {strides = array<i32>} : memref<1x2x32xf32, #tpu.memory_space<vmem>>, vector<1x2x32xf32>,
    %c0_105 = arith.constant 0 : index
    %200 = arith.index_cast %159 : i32 to index
    %c0_106 = arith.constant 0 : index
    %c0_107 = arith.constant 0 : index
    %201 = vector.load %arg5[%c0_105, %200, %c0_106, %c0_107] : memref<1x8x2x32xf32, #tpu.memory_space<vmem>>, vector<1x1x2x32xf32>
    %202 = vector.shape_cast %201 : vector<1x1x2x32xf32> to vector<2x32xf32>
    %203 = vector.shape_cast %193 : vector<2x32xf32> to vector<1x1x2x32xf32>
    tpu.vector_store %arg5[%c0_105, %200, %c0_106, %c0_107], %203 {strides = array<i32>} : memref<1x8x2x32xf32, #tpu.memory_space<vmem>>, vector<1x1x2x32xf32>,
    %c4_i32 = arith.constant 4 : i32
    %c2_i32_108 = arith.constant 2 : i32
    %204 = arith.muli %c2_i32_108, %c4_i32 : i32
    %c7_i32_109 = arith.constant 7 : i32
    %205 = arith.subi %c7_i32_109, %204 : i32
    %206 = arith.muli %arg0, %205 : i32
    %207 = arith.addi %c4_i32, %206 : i32
    %c0_110 = arith.constant 0 : index
    %208 = arith.index_cast %207 : i32 to index
    %c0_111 = arith.constant 0 : index
    %c0_112 = arith.constant 0 : index
    %209 = vector.load %arg1[%c0_110, %208, %c0_111, %c0_112] : memref<1x8x2x128xf32, #tpu.memory_space<vmem>>, vector<1x1x2x128xf32>
    %210 = vector.shape_cast %209 : vector<1x1x2x128xf32> to vector<2x128xf32>
    %c0_113 = arith.constant 0 : index
    %c0_114 = arith.constant 0 : index
    %c0_115 = arith.constant 0 : index
    %211 = vector.load %arg6[%c0_113, %c0_114, %c0_115] : memref<1x2x32xf32, #tpu.memory_space<vmem>>, vector<1x2x32xf32>
    %212 = vector.shape_cast %211 : vector<1x2x32xf32> to vector<2x32xf32>
    %cst_116 = arith.constant dense<0.000000e+00> : vector<2x128xf32>
    %213 = tpu.matmul %212, %11, %cst_116 {dimension_numbers = #tpu.dot_dimension_numbers<[1], [0], [0], [1], [0, 0, 1, 1], [], []>} : vector<2x32xf32>, vector<32x128xf32>, vector<2x128xf32> -> vector<2x128xf32>
    %214 = arith.addf %210, %213 : vector<2x128xf32>
    %215 = vector.extract_strided_slice %214 {offsets = [0, 0], sizes = [2, 32], strides = [1, 1]} : vector<2x128xf32> to vector<2x32xf32>
    %216 = arith.negf %215 : vector<2x32xf32>
    %217 = math.exp %216 : vector<2x32xf32>
    %cst_117 = arith.constant 1.000000e+00 : f32
    %218 = vector.broadcast %cst_117 : f32 to vector<2x32xf32>
    %219 = arith.addf %218, %217 : vector<2x32xf32>
    %220 = arith.divf %218, %219 : vector<2x32xf32>
    %221 = vector.extract_strided_slice %214 {offsets = [0, 32], sizes = [2, 32], strides = [1, 1]} : vector<2x128xf32> to vector<2x32xf32>
    %222 = arith.negf %221 : vector<2x32xf32>
    %223 = math.exp %222 : vector<2x32xf32>
    %cst_118 = arith.constant 1.000000e+00 : f32
    %224 = vector.broadcast %cst_118 : f32 to vector<2x32xf32>
    %225 = arith.addf %224, %223 : vector<2x32xf32>
    %226 = arith.divf %224, %225 : vector<2x32xf32>
    %227 = vector.extract_strided_slice %214 {offsets = [0, 64], sizes = [2, 32], strides = [1, 1]} : vector<2x128xf32> to vector<2x32xf32>
    %228 = math.tanh %227 : vector<2x32xf32>
    %229 = vector.extract_strided_slice %214 {offsets = [0, 96], sizes = [2, 32], strides = [1, 1]} : vector<2x128xf32> to vector<2x32xf32>
    %230 = arith.negf %229 : vector<2x32xf32>
    %231 = math.exp %230 : vector<2x32xf32>
    %cst_119 = arith.constant 1.000000e+00 : f32
    %232 = vector.broadcast %cst_119 : f32 to vector<2x32xf32>
    %233 = arith.addf %232, %231 : vector<2x32xf32>
    %234 = arith.divf %232, %233 : vector<2x32xf32>
    %c0_120 = arith.constant 0 : index
    %c0_121 = arith.constant 0 : index
    %c0_122 = arith.constant 0 : index
    %235 = vector.load %arg7[%c0_120, %c0_121, %c0_122] : memref<1x2x32xf32, #tpu.memory_space<vmem>>, vector<1x2x32xf32>
    %236 = vector.shape_cast %235 : vector<1x2x32xf32> to vector<2x32xf32>
    %237 = arith.mulf %226, %236 : vector<2x32xf32>
    %238 = arith.mulf %220, %228 : vector<2x32xf32>
    %239 = arith.addf %237, %238 : vector<2x32xf32>
    %240 = math.tanh %239 : vector<2x32xf32>
    %241 = arith.mulf %234, %240 : vector<2x32xf32>
    %c0_123 = arith.constant 0 : index
    %c0_124 = arith.constant 0 : index
    %c0_125 = arith.constant 0 : index
    %242 = vector.load %arg7[%c0_123, %c0_124, %c0_125] : memref<1x2x32xf32, #tpu.memory_space<vmem>>, vector<1x2x32xf32>
    %243 = vector.shape_cast %242 : vector<1x2x32xf32> to vector<2x32xf32>
    %244 = vector.shape_cast %239 : vector<2x32xf32> to vector<1x2x32xf32>
    tpu.vector_store %arg7[%c0_123, %c0_124, %c0_125], %244 {strides = array<i32>} : memref<1x2x32xf32, #tpu.memory_space<vmem>>, vector<1x2x32xf32>,
    %c0_126 = arith.constant 0 : index
    %c0_127 = arith.constant 0 : index
    %c0_128 = arith.constant 0 : index
    %245 = vector.load %arg6[%c0_126, %c0_127, %c0_128] : memref<1x2x32xf32, #tpu.memory_space<vmem>>, vector<1x2x32xf32>
    %246 = vector.shape_cast %245 : vector<1x2x32xf32> to vector<2x32xf32>
    %247 = vector.shape_cast %241 : vector<2x32xf32> to vector<1x2x32xf32>
    tpu.vector_store %arg6[%c0_126, %c0_127, %c0_128], %247 {strides = array<i32>} : memref<1x2x32xf32, #tpu.memory_space<vmem>>, vector<1x2x32xf32>,
    %c0_129 = arith.constant 0 : index
    %248 = arith.index_cast %207 : i32 to index
    %c0_130 = arith.constant 0 : index
    %c0_131 = arith.constant 0 : index
    %249 = vector.load %arg5[%c0_129, %248, %c0_130, %c0_131] : memref<1x8x2x32xf32, #tpu.memory_space<vmem>>, vector<1x1x2x32xf32>
    %250 = vector.shape_cast %249 : vector<1x1x2x32xf32> to vector<2x32xf32>
    %251 = vector.shape_cast %241 : vector<2x32xf32> to vector<1x1x2x32xf32>
    tpu.vector_store %arg5[%c0_129, %248, %c0_130, %c0_131], %251 {strides = array<i32>} : memref<1x8x2x32xf32, #tpu.memory_space<vmem>>, vector<1x1x2x32xf32>,
    %c5_i32 = arith.constant 5 : i32
    %c2_i32_132 = arith.constant 2 : i32
    %252 = arith.muli %c2_i32_132, %c5_i32 : i32
    %c7_i32_133 = arith.constant 7 : i32
    %253 = arith.subi %c7_i32_133, %252 : i32
    %254 = arith.muli %arg0, %253 : i32
    %255 = arith.addi %c5_i32, %254 : i32
    %c0_134 = arith.constant 0 : index
    %256 = arith.index_cast %255 : i32 to index
    %c0_135 = arith.constant 0 : index
    %c0_136 = arith.constant 0 : index
    %257 = vector.load %arg1[%c0_134, %256, %c0_135, %c0_136] : memref<1x8x2x128xf32, #tpu.memory_space<vmem>>, vector<1x1x2x128xf32>
    %258 = vector.shape_cast %257 : vector<1x1x2x128xf32> to vector<2x128xf32>
    %c0_137 = arith.constant 0 : index
    %c0_138 = arith.constant 0 : index
    %c0_139 = arith.constant 0 : index
    %259 = vector.load %arg6[%c0_137, %c0_138, %c0_139] : memref<1x2x32xf32, #tpu.memory_space<vmem>>, vector<1x2x32xf32>
    %260 = vector.shape_cast %259 : vector<1x2x32xf32> to vector<2x32xf32>
    %cst_140 = arith.constant dense<0.000000e+00> : vector<2x128xf32>
    %261 = tpu.matmul %260, %11, %cst_140 {dimension_numbers = #tpu.dot_dimension_numbers<[1], [0], [0], [1], [0, 0, 1, 1], [], []>} : vector<2x32xf32>, vector<32x128xf32>, vector<2x128xf32> -> vector<2x128xf32>
    %262 = arith.addf %258, %261 : vector<2x128xf32>
    %263 = vector.extract_strided_slice %262 {offsets = [0, 0], sizes = [2, 32], strides = [1, 1]} : vector<2x128xf32> to vector<2x32xf32>
    %264 = arith.negf %263 : vector<2x32xf32>
    %265 = math.exp %264 : vector<2x32xf32>
    %cst_141 = arith.constant 1.000000e+00 : f32
    %266 = vector.broadcast %cst_141 : f32 to vector<2x32xf32>
    %267 = arith.addf %266, %265 : vector<2x32xf32>
    %268 = arith.divf %266, %267 : vector<2x32xf32>
    %269 = vector.extract_strided_slice %262 {offsets = [0, 32], sizes = [2, 32], strides = [1, 1]} : vector<2x128xf32> to vector<2x32xf32>
    %270 = arith.negf %269 : vector<2x32xf32>
    %271 = math.exp %270 : vector<2x32xf32>
    %cst_142 = arith.constant 1.000000e+00 : f32
    %272 = vector.broadcast %cst_142 : f32 to vector<2x32xf32>
    %273 = arith.addf %272, %271 : vector<2x32xf32>
    %274 = arith.divf %272, %273 : vector<2x32xf32>
    %275 = vector.extract_strided_slice %262 {offsets = [0, 64], sizes = [2, 32], strides = [1, 1]} : vector<2x128xf32> to vector<2x32xf32>
    %276 = math.tanh %275 : vector<2x32xf32>
    %277 = vector.extract_strided_slice %262 {offsets = [0, 96], sizes = [2, 32], strides = [1, 1]} : vector<2x128xf32> to vector<2x32xf32>
    %278 = arith.negf %277 : vector<2x32xf32>
    %279 = math.exp %278 : vector<2x32xf32>
    %cst_143 = arith.constant 1.000000e+00 : f32
    %280 = vector.broadcast %cst_143 : f32 to vector<2x32xf32>
    %281 = arith.addf %280, %279 : vector<2x32xf32>
    %282 = arith.divf %280, %281 : vector<2x32xf32>
    %c0_144 = arith.constant 0 : index
    %c0_145 = arith.constant 0 : index
    %c0_146 = arith.constant 0 : index
    %283 = vector.load %arg7[%c0_144, %c0_145, %c0_146] : memref<1x2x32xf32, #tpu.memory_space<vmem>>, vector<1x2x32xf32>
    %284 = vector.shape_cast %283 : vector<1x2x32xf32> to vector<2x32xf32>
    %285 = arith.mulf %274, %284 : vector<2x32xf32>
    %286 = arith.mulf %268, %276 : vector<2x32xf32>
    %287 = arith.addf %285, %286 : vector<2x32xf32>
    %288 = math.tanh %287 : vector<2x32xf32>
    %289 = arith.mulf %282, %288 : vector<2x32xf32>
    %c0_147 = arith.constant 0 : index
    %c0_148 = arith.constant 0 : index
    %c0_149 = arith.constant 0 : index
    %290 = vector.load %arg7[%c0_147, %c0_148, %c0_149] : memref<1x2x32xf32, #tpu.memory_space<vmem>>, vector<1x2x32xf32>
    %291 = vector.shape_cast %290 : vector<1x2x32xf32> to vector<2x32xf32>
    %292 = vector.shape_cast %287 : vector<2x32xf32> to vector<1x2x32xf32>
    tpu.vector_store %arg7[%c0_147, %c0_148, %c0_149], %292 {strides = array<i32>} : memref<1x2x32xf32, #tpu.memory_space<vmem>>, vector<1x2x32xf32>,
    %c0_150 = arith.constant 0 : index
    %c0_151 = arith.constant 0 : index
    %c0_152 = arith.constant 0 : index
    %293 = vector.load %arg6[%c0_150, %c0_151, %c0_152] : memref<1x2x32xf32, #tpu.memory_space<vmem>>, vector<1x2x32xf32>
    %294 = vector.shape_cast %293 : vector<1x2x32xf32> to vector<2x32xf32>
    %295 = vector.shape_cast %289 : vector<2x32xf32> to vector<1x2x32xf32>
    tpu.vector_store %arg6[%c0_150, %c0_151, %c0_152], %295 {strides = array<i32>} : memref<1x2x32xf32, #tpu.memory_space<vmem>>, vector<1x2x32xf32>,
    %c0_153 = arith.constant 0 : index
    %296 = arith.index_cast %255 : i32 to index
    %c0_154 = arith.constant 0 : index
    %c0_155 = arith.constant 0 : index
    %297 = vector.load %arg5[%c0_153, %296, %c0_154, %c0_155] : memref<1x8x2x32xf32, #tpu.memory_space<vmem>>, vector<1x1x2x32xf32>
    %298 = vector.shape_cast %297 : vector<1x1x2x32xf32> to vector<2x32xf32>
    %299 = vector.shape_cast %289 : vector<2x32xf32> to vector<1x1x2x32xf32>
    tpu.vector_store %arg5[%c0_153, %296, %c0_154, %c0_155], %299 {strides = array<i32>} : memref<1x8x2x32xf32, #tpu.memory_space<vmem>>, vector<1x1x2x32xf32>,
    %c6_i32 = arith.constant 6 : i32
    %c2_i32_156 = arith.constant 2 : i32
    %300 = arith.muli %c2_i32_156, %c6_i32 : i32
    %c7_i32_157 = arith.constant 7 : i32
    %301 = arith.subi %c7_i32_157, %300 : i32
    %302 = arith.muli %arg0, %301 : i32
    %303 = arith.addi %c6_i32, %302 : i32
    %c0_158 = arith.constant 0 : index
    %304 = arith.index_cast %303 : i32 to index
    %c0_159 = arith.constant 0 : index
    %c0_160 = arith.constant 0 : index
    %305 = vector.load %arg1[%c0_158, %304, %c0_159, %c0_160] : memref<1x8x2x128xf32, #tpu.memory_space<vmem>>, vector<1x1x2x128xf32>
    %306 = vector.shape_cast %305 : vector<1x1x2x128xf32> to vector<2x128xf32>
    %c0_161 = arith.constant 0 : index
    %c0_162 = arith.constant 0 : index
    %c0_163 = arith.constant 0 : index
    %307 = vector.load %arg6[%c0_161, %c0_162, %c0_163] : memref<1x2x32xf32, #tpu.memory_space<vmem>>, vector<1x2x32xf32>
    %308 = vector.shape_cast %307 : vector<1x2x32xf32> to vector<2x32xf32>
    %cst_164 = arith.constant dense<0.000000e+00> : vector<2x128xf32>
    %309 = tpu.matmul %308, %11, %cst_164 {dimension_numbers = #tpu.dot_dimension_numbers<[1], [0], [0], [1], [0, 0, 1, 1], [], []>} : vector<2x32xf32>, vector<32x128xf32>, vector<2x128xf32> -> vector<2x128xf32>
    %310 = arith.addf %306, %309 : vector<2x128xf32>
    %311 = vector.extract_strided_slice %310 {offsets = [0, 0], sizes = [2, 32], strides = [1, 1]} : vector<2x128xf32> to vector<2x32xf32>
    %312 = arith.negf %311 : vector<2x32xf32>
    %313 = math.exp %312 : vector<2x32xf32>
    %cst_165 = arith.constant 1.000000e+00 : f32
    %314 = vector.broadcast %cst_165 : f32 to vector<2x32xf32>
    %315 = arith.addf %314, %313 : vector<2x32xf32>
    %316 = arith.divf %314, %315 : vector<2x32xf32>
    %317 = vector.extract_strided_slice %310 {offsets = [0, 32], sizes = [2, 32], strides = [1, 1]} : vector<2x128xf32> to vector<2x32xf32>
    %318 = arith.negf %317 : vector<2x32xf32>
    %319 = math.exp %318 : vector<2x32xf32>
    %cst_166 = arith.constant 1.000000e+00 : f32
    %320 = vector.broadcast %cst_166 : f32 to vector<2x32xf32>
    %321 = arith.addf %320, %319 : vector<2x32xf32>
    %322 = arith.divf %320, %321 : vector<2x32xf32>
    %323 = vector.extract_strided_slice %310 {offsets = [0, 64], sizes = [2, 32], strides = [1, 1]} : vector<2x128xf32> to vector<2x32xf32>
    %324 = math.tanh %323 : vector<2x32xf32>
    %325 = vector.extract_strided_slice %310 {offsets = [0, 96], sizes = [2, 32], strides = [1, 1]} : vector<2x128xf32> to vector<2x32xf32>
    %326 = arith.negf %325 : vector<2x32xf32>
    %327 = math.exp %326 : vector<2x32xf32>
    %cst_167 = arith.constant 1.000000e+00 : f32
    %328 = vector.broadcast %cst_167 : f32 to vector<2x32xf32>
    %329 = arith.addf %328, %327 : vector<2x32xf32>
    %330 = arith.divf %328, %329 : vector<2x32xf32>
    %c0_168 = arith.constant 0 : index
    %c0_169 = arith.constant 0 : index
    %c0_170 = arith.constant 0 : index
    %331 = vector.load %arg7[%c0_168, %c0_169, %c0_170] : memref<1x2x32xf32, #tpu.memory_space<vmem>>, vector<1x2x32xf32>
    %332 = vector.shape_cast %331 : vector<1x2x32xf32> to vector<2x32xf32>
    %333 = arith.mulf %322, %332 : vector<2x32xf32>
    %334 = arith.mulf %316, %324 : vector<2x32xf32>
    %335 = arith.addf %333, %334 : vector<2x32xf32>
    %336 = math.tanh %335 : vector<2x32xf32>
    %337 = arith.mulf %330, %336 : vector<2x32xf32>
    %c0_171 = arith.constant 0 : index
    %c0_172 = arith.constant 0 : index
    %c0_173 = arith.constant 0 : index
    %338 = vector.load %arg7[%c0_171, %c0_172, %c0_173] : memref<1x2x32xf32, #tpu.memory_space<vmem>>, vector<1x2x32xf32>
    %339 = vector.shape_cast %338 : vector<1x2x32xf32> to vector<2x32xf32>
    %340 = vector.shape_cast %335 : vector<2x32xf32> to vector<1x2x32xf32>
    tpu.vector_store %arg7[%c0_171, %c0_172, %c0_173], %340 {strides = array<i32>} : memref<1x2x32xf32, #tpu.memory_space<vmem>>, vector<1x2x32xf32>,
    %c0_174 = arith.constant 0 : index
    %c0_175 = arith.constant 0 : index
    %c0_176 = arith.constant 0 : index
    %341 = vector.load %arg6[%c0_174, %c0_175, %c0_176] : memref<1x2x32xf32, #tpu.memory_space<vmem>>, vector<1x2x32xf32>
    %342 = vector.shape_cast %341 : vector<1x2x32xf32> to vector<2x32xf32>
    %343 = vector.shape_cast %337 : vector<2x32xf32> to vector<1x2x32xf32>
    tpu.vector_store %arg6[%c0_174, %c0_175, %c0_176], %343 {strides = array<i32>} : memref<1x2x32xf32, #tpu.memory_space<vmem>>, vector<1x2x32xf32>,
    %c0_177 = arith.constant 0 : index
    %344 = arith.index_cast %303 : i32 to index
    %c0_178 = arith.constant 0 : index
    %c0_179 = arith.constant 0 : index
    %345 = vector.load %arg5[%c0_177, %344, %c0_178, %c0_179] : memref<1x8x2x32xf32, #tpu.memory_space<vmem>>, vector<1x1x2x32xf32>
    %346 = vector.shape_cast %345 : vector<1x1x2x32xf32> to vector<2x32xf32>
    %347 = vector.shape_cast %337 : vector<2x32xf32> to vector<1x1x2x32xf32>
    tpu.vector_store %arg5[%c0_177, %344, %c0_178, %c0_179], %347 {strides = array<i32>} : memref<1x8x2x32xf32, #tpu.memory_space<vmem>>, vector<1x1x2x32xf32>,
    %c7_i32_180 = arith.constant 7 : i32
    %c2_i32_181 = arith.constant 2 : i32
    %348 = arith.muli %c2_i32_181, %c7_i32_180 : i32
    %c7_i32_182 = arith.constant 7 : i32
    %349 = arith.subi %c7_i32_182, %348 : i32
    %350 = arith.muli %arg0, %349 : i32
    %351 = arith.addi %c7_i32_180, %350 : i32
    %c0_183 = arith.constant 0 : index
    %352 = arith.index_cast %351 : i32 to index
    %c0_184 = arith.constant 0 : index
    %c0_185 = arith.constant 0 : index
    %353 = vector.load %arg1[%c0_183, %352, %c0_184, %c0_185] : memref<1x8x2x128xf32, #tpu.memory_space<vmem>>, vector<1x1x2x128xf32>
    %354 = vector.shape_cast %353 : vector<1x1x2x128xf32> to vector<2x128xf32>
    %c0_186 = arith.constant 0 : index
    %c0_187 = arith.constant 0 : index
    %c0_188 = arith.constant 0 : index
    %355 = vector.load %arg6[%c0_186, %c0_187, %c0_188] : memref<1x2x32xf32, #tpu.memory_space<vmem>>, vector<1x2x32xf32>
    %356 = vector.shape_cast %355 : vector<1x2x32xf32> to vector<2x32xf32>
    %cst_189 = arith.constant dense<0.000000e+00> : vector<2x128xf32>
    %357 = tpu.matmul %356, %11, %cst_189 {dimension_numbers = #tpu.dot_dimension_numbers<[1], [0], [0], [1], [0, 0, 1, 1], [], []>} : vector<2x32xf32>, vector<32x128xf32>, vector<2x128xf32> -> vector<2x128xf32>
    %358 = arith.addf %354, %357 : vector<2x128xf32>
    %359 = vector.extract_strided_slice %358 {offsets = [0, 0], sizes = [2, 32], strides = [1, 1]} : vector<2x128xf32> to vector<2x32xf32>
    %360 = arith.negf %359 : vector<2x32xf32>
    %361 = math.exp %360 : vector<2x32xf32>
    %cst_190 = arith.constant 1.000000e+00 : f32
    %362 = vector.broadcast %cst_190 : f32 to vector<2x32xf32>
    %363 = arith.addf %362, %361 : vector<2x32xf32>
    %364 = arith.divf %362, %363 : vector<2x32xf32>
    %365 = vector.extract_strided_slice %358 {offsets = [0, 32], sizes = [2, 32], strides = [1, 1]} : vector<2x128xf32> to vector<2x32xf32>
    %366 = arith.negf %365 : vector<2x32xf32>
    %367 = math.exp %366 : vector<2x32xf32>
    %cst_191 = arith.constant 1.000000e+00 : f32
    %368 = vector.broadcast %cst_191 : f32 to vector<2x32xf32>
    %369 = arith.addf %368, %367 : vector<2x32xf32>
    %370 = arith.divf %368, %369 : vector<2x32xf32>
    %371 = vector.extract_strided_slice %358 {offsets = [0, 64], sizes = [2, 32], strides = [1, 1]} : vector<2x128xf32> to vector<2x32xf32>
    %372 = math.tanh %371 : vector<2x32xf32>
    %373 = vector.extract_strided_slice %358 {offsets = [0, 96], sizes = [2, 32], strides = [1, 1]} : vector<2x128xf32> to vector<2x32xf32>
    %374 = arith.negf %373 : vector<2x32xf32>
    %375 = math.exp %374 : vector<2x32xf32>
    %cst_192 = arith.constant 1.000000e+00 : f32
    %376 = vector.broadcast %cst_192 : f32 to vector<2x32xf32>
    %377 = arith.addf %376, %375 : vector<2x32xf32>
    %378 = arith.divf %376, %377 : vector<2x32xf32>
    %c0_193 = arith.constant 0 : index
    %c0_194 = arith.constant 0 : index
    %c0_195 = arith.constant 0 : index
    %379 = vector.load %arg7[%c0_193, %c0_194, %c0_195] : memref<1x2x32xf32, #tpu.memory_space<vmem>>, vector<1x2x32xf32>
    %380 = vector.shape_cast %379 : vector<1x2x32xf32> to vector<2x32xf32>
    %381 = arith.mulf %370, %380 : vector<2x32xf32>
    %382 = arith.mulf %364, %372 : vector<2x32xf32>
    %383 = arith.addf %381, %382 : vector<2x32xf32>
    %384 = math.tanh %383 : vector<2x32xf32>
    %385 = arith.mulf %378, %384 : vector<2x32xf32>
    %c0_196 = arith.constant 0 : index
    %c0_197 = arith.constant 0 : index
    %c0_198 = arith.constant 0 : index
    %386 = vector.load %arg7[%c0_196, %c0_197, %c0_198] : memref<1x2x32xf32, #tpu.memory_space<vmem>>, vector<1x2x32xf32>
    %387 = vector.shape_cast %386 : vector<1x2x32xf32> to vector<2x32xf32>
    %388 = vector.shape_cast %383 : vector<2x32xf32> to vector<1x2x32xf32>
    tpu.vector_store %arg7[%c0_196, %c0_197, %c0_198], %388 {strides = array<i32>} : memref<1x2x32xf32, #tpu.memory_space<vmem>>, vector<1x2x32xf32>,
    %c0_199 = arith.constant 0 : index
    %c0_200 = arith.constant 0 : index
    %c0_201 = arith.constant 0 : index
    %389 = vector.load %arg6[%c0_199, %c0_200, %c0_201] : memref<1x2x32xf32, #tpu.memory_space<vmem>>, vector<1x2x32xf32>
    %390 = vector.shape_cast %389 : vector<1x2x32xf32> to vector<2x32xf32>
    %391 = vector.shape_cast %385 : vector<2x32xf32> to vector<1x2x32xf32>
    tpu.vector_store %arg6[%c0_199, %c0_200, %c0_201], %391 {strides = array<i32>} : memref<1x2x32xf32, #tpu.memory_space<vmem>>, vector<1x2x32xf32>,
    %c0_202 = arith.constant 0 : index
    %392 = arith.index_cast %351 : i32 to index
    %c0_203 = arith.constant 0 : index
    %c0_204 = arith.constant 0 : index
    %393 = vector.load %arg5[%c0_202, %392, %c0_203, %c0_204] : memref<1x8x2x32xf32, #tpu.memory_space<vmem>>, vector<1x1x2x32xf32>
    %394 = vector.shape_cast %393 : vector<1x1x2x32xf32> to vector<2x32xf32>
    %395 = vector.shape_cast %385 : vector<2x32xf32> to vector<1x1x2x32xf32>
    tpu.vector_store %arg5[%c0_202, %392, %c0_203, %c0_204], %395 {strides = array<i32>} : memref<1x8x2x32xf32, #tpu.memory_space<vmem>>, vector<1x1x2x32xf32>,
    %c8_i32 = arith.constant 8 : i32
    return
  }
  func.func @transform_0(%arg0: i32) -> (i32, i32, i32, i32) {
    %c0_i32 = arith.constant 0 : i32
    %c0_i32_0 = arith.constant 0 : i32
    %c0_i32_1 = arith.constant 0 : i32
    %c0_i32_2 = arith.constant 0 : i32
    return %arg0, %c0_i32, %c0_i32_0, %c0_i32_1 : i32, i32, i32, i32
  }
  func.func @transform_1(%arg0: i32) -> (i32, i32, i32) {
    %c0_i32 = arith.constant 0 : i32
    %c0_i32_0 = arith.constant 0 : i32
    %c0_i32_1 = arith.constant 0 : i32
    return %arg0, %c0_i32, %c0_i32_0 : i32, i32, i32
  }
  func.func @transform_2(%arg0: i32) -> (i32, i32, i32) {
    %c0_i32 = arith.constant 0 : i32
    %c0_i32_0 = arith.constant 0 : i32
    %c0_i32_1 = arith.constant 0 : i32
    return %arg0, %c0_i32, %c0_i32_0 : i32, i32, i32
  }
  func.func @transform_3(%arg0: i32) -> (i32, i32, i32) {
    %c0_i32 = arith.constant 0 : i32
    %c0_i32_0 = arith.constant 0 : i32
    %c0_i32_1 = arith.constant 0 : i32
    return %arg0, %c0_i32, %c0_i32_0 : i32, i32, i32
  }
  func.func @transform_4(%arg0: i32) -> (i32, i32, i32, i32) {
    %c0_i32 = arith.constant 0 : i32
    %c0_i32_0 = arith.constant 0 : i32
    %c0_i32_1 = arith.constant 0 : i32
    %c0_i32_2 = arith.constant 0 : i32
    return %arg0, %c0_i32, %c0_i32_0, %c0_i32_1 : i32, i32, i32, i32
  }
  func.func @transform_5(%arg0: i32) -> (i32, i32, i32) {
    %c0_i32 = arith.constant 0 : i32
    %c0_i32_0 = arith.constant 0 : i32
    %c0_i32_1 = arith.constant 0 : i32
    return %arg0, %c0_i32, %c0_i32_0 : i32, i32, i32
  }
  func.func @transform_6(%arg0: i32) -> (i32, i32, i32) {
    %c0_i32 = arith.constant 0 : i32
    %c0_i32_0 = arith.constant 0 : i32
    %c0_i32_1 = arith.constant 0 : i32
    return %arg0, %c0_i32, %c0_i32_0 : i32, i32, i32
  }
}

</mosaic_0001>

<llo_original>
// kernel: tpu_custom_call.1
$region0: #{tpu_custom_call.1}
  #allocation0 [shape = 'u32[]', space=smem, size = 0x4, offset = 0x4, fixed_abs, tag = 'smem constant byte address 0x4 - core index']
  #allocation1 [shape = 'u32[72,128]{1,0:T(1,128)}', space=vmem, size = 0x9000, scoped, tag = 'internal scratch']
  %s0 = inlined_call_operand.hbm [shape: f32[2,8,2,128], index: 0, kind: input, shape index: {}]
  %s1 = inlined_call_operand.hbm [shape: f32[2,32,128], index: 1, kind: input, shape index: {}]
  %s2 = inlined_call_operand.hbm [shape: f32[2,2,32], index: 2, kind: input, shape index: {}]
  %s3 = inlined_call_operand.hbm [shape: f32[2,2,32], index: 3, kind: input, shape index: {}]
  %s4 = inlined_call_operand.hbm [shape: f32[2,8,2,32], index: 4, kind: output, shape index: {0}]
  %s5 = inlined_call_operand.hbm [shape: f32[2,2,32], index: 5, kind: output, shape index: {1}]
  %s6 = inlined_call_operand.hbm [shape: f32[2,2,32], index: 6, kind: output, shape index: {2}]
  %7 = xla_tuple %s4, %s5, %s6
  %s8 = sld [smem:[#allocation0]]
  $region81: #{tpu_custom_call.1} parent=0
    _
  %s10 = ssub.s32 1, %s8
  %s11 = scalar_select 0, %s10, %s8
  $region1: #{tpu_custom_call.1} parent=0
    #allocation2 [shape = 'u8[16384]{0}', space=vmem, size = 0x4000, scoped, tag = 'input window, operand 0']
    #allocation3 [shape = 's32[2]{0}', space=sflag, size = 0x8, scoped, tag = 'scoped memory for tpu_custom_call.1']
    #allocation4 [shape = 's32[2]{0}', space=sflag, size = 0x8, scoped, tag = 'scoped memory for tpu_custom_call.1']
    #allocation5 [shape = 'u8[32768]{0}', space=vmem, size = 0x8000, scoped, tag = 'input window, operand 1']
    #allocation6 [shape = 's32[2]{0}', space=sflag, size = 0x8, scoped, tag = 'scoped memory for tpu_custom_call.1']
    #allocation7 [shape = 'u8[2048]{0}', space=vmem, size = 0x800, scoped, tag = 'input window, operand 2']
    #allocation8 [shape = 'u8[2048]{0}', space=vmem, size = 0x800, scoped, tag = 'input window, operand 3']
    #allocation9 [shape = 's32[2]{0}', space=sflag, size = 0x8, scoped, tag = 'scoped memory for tpu_custom_call.1']
    #allocation10 [shape = 'u8[16384]{0}', space=vmem, size = 0x4000, scoped, tag = 'output window, operand 0']
    #allocation11 [shape = 'u8[2048]{0}', space=vmem, size = 0x800, scoped, tag = 'output window, operand 1']
    #allocation12 [shape = 's32[2]{0}', space=sflag, size = 0x8, scoped, tag = 'scoped memory for tpu_custom_call.1']
    #allocation13 [shape = 'u8[2048]{0}', space=vmem, size = 0x800, scoped, tag = 'output window, operand 2']
    %12 = vsyncpa [#allocation3], 0
    %s13 = scalar_lea.sflag [#allocation3], 1
    %14 = vsyncpa %s13, 0
    %15 = vsyncpa [#allocation6], 0
    %s16 = scalar_lea.sflag [#allocation6], 1
    %17 = vsyncpa %s16, 0
    %18 = vsyncpa [#allocation9], 0
    %s19 = scalar_lea.sflag [#allocation9], 1
    %20 = vsyncpa %s19, 0
    %21 = vsyncpa [#allocation4], 0
    %s22 = scalar_lea.sflag [#allocation4], 1
    %23 = vsyncpa %s22, 0
    %24 = vsyncpa [#allocation12], 0
    %s25 = scalar_lea.sflag [#allocation12], 1
    %26 = vsyncpa %s25, 0
    loop: start=0, step=1, limit=4
    $region2: #{tpu_custom_call.1} parent=1 // loop_pre_header
      _
    $region3: #{tpu_custom_call.1} parent=1 // loop_header
      %s28 = sphi 0, %s32
      %p29 = scmp.ge.s32.totalorder %s28, 4
      %s38 = sphi 0, %s40
      %s41 = sphi 0, %s38
      %s42 = sphi 0, %s41
      %s58 = sphi 0, %s42
      %s64 = sphi 0, %s66
      %s67 = sphi 0, %s64
      %s68 = sphi 0, %s67
      %s84 = sphi 0, %s68
      %s90 = sphi 0, %s92
      %s93 = sphi 0, %s90
      %s94 = sphi 0, %s93
      %s110 = sphi 0, %s94
      %s116 = sphi 0, %s118
      %s119 = sphi 0, %s116
      %s120 = sphi 0, %s119
      %s136 = sphi 0, %s120
      %s142 = sphi 0, %s144
      %s145 = sphi 0, %s142
      %s146 = sphi 0, %s145
      %s162 = sphi 0, %s146
      %s168 = sphi 0, %s170
      %s171 = sphi 0, %s168
      %s172 = sphi 0, %s171
      %s188 = sphi 0, %s172
      %s194 = sphi 0, %s196
      %s197 = sphi 0, %s194
      %s198 = sphi 0, %s197
      %s214 = sphi 0, %s198
    $region4: #{tpu_custom_call.1} parent=1 // loop_header_branch
      %31 = sbr.rel (%p29) target = $region8
    $region5: #{tpu_custom_call.1} parent=1 // loop_body
      %s33 = ssub.s32 %s28, 1
      %s34 = ssub.s32 %s28, 2
      %s35 = sadd.s32 %s28, 1
      %s36 = ssub.s32 %s28, %s35
      %p37 = scmp.eq.s32.totalorder %s36, 0
      %s39 = sadd.s32 %s38, 1
      %s40 = scalar_select %p37, %s38, %s39
      %p43 = pneg %p37
      %p44 = scmp.eq.s32.totalorder %s28, 1
      %p45 = por %p43, %p44
      %p46 = scmp.ne.s32.totalorder %s38, %s41
      %p47 = scmp.eq.s32.totalorder %s28, 0
      %p48 = por %p46, %p47
      %p49 = scmp.ne.s32.totalorder %s38, %s41
      %p50 = scmp.eq.s32.totalorder %s33, 1
      %p51 = por %p49, %p50
      %p52 = scmp.ne.s32.totalorder %s41, %s42
      %p53 = scmp.eq.s32.totalorder %s33, 0
      %p54 = por %p52, %p53
      %p55 = scmp.ne.s32.totalorder %s41, %s42
      %p56 = scmp.eq.s32.totalorder %s34, 1
      %p57 = por %p55, %p56
      %p59 = scmp.ne.s32.totalorder %s42, %s58
      %p60 = scmp.eq.s32.totalorder %s34, 0
      %p61 = por %p59, %p60
      %s62 = ssub.s32 %s28, %s35
      %p63 = scmp.eq.s32.totalorder %s62, 0
      %s65 = sadd.s32 %s64, 1
      %s66 = scalar_select %p63, %s64, %s65
      %p69 = pneg %p63
      %p70 = scmp.eq.s32.totalorder %s28, 1
      %p71 = por %p69, %p70
      %p72 = scmp.ne.s32.totalorder %s64, %s67
      %p73 = scmp.eq.s32.totalorder %s28, 0
      %p74 = por %p72, %p73
      %p75 = scmp.ne.s32.totalorder %s64, %s67
      %p76 = scmp.eq.s32.totalorder %s33, 1
      %p77 = por %p75, %p76
      %p78 = scmp.ne.s32.totalorder %s67, %s68
      %p79 = scmp.eq.s32.totalorder %s33, 0
      %p80 = por %p78, %p79
      %p81 = scmp.ne.s32.totalorder %s67, %s68
      %p82 = scmp.eq.s32.totalorder %s34, 1
      %p83 = por %p81, %p82
      %p85 = scmp.ne.s32.totalorder %s68, %s84
      %p86 = scmp.eq.s32.totalorder %s34, 0
      %p87 = por %p85, %p86
      %s88 = ssub.s32 %s28, %s35
      %p89 = scmp.eq.s32.totalorder %s88, 0
      %s91 = sadd.s32 %s90, 1
      %s92 = scalar_select %p89, %s90, %s91
      %p95 = pneg %p89
      %p96 = scmp.eq.s32.totalorder %s28, 1
      %p97 = por %p95, %p96
      %p98 = scmp.ne.s32.totalorder %s90, %s93
      %p99 = scmp.eq.s32.totalorder %s28, 0
      %p100 = por %p98, %p99
      %p101 = scmp.ne.s32.totalorder %s90, %s93
      %p102 = scmp.eq.s32.totalorder %s33, 1
      %p103 = por %p101, %p102
      %p104 = scmp.ne.s32.totalorder %s93, %s94
      %p105 = scmp.eq.s32.totalorder %s33, 0
      %p106 = por %p104, %p105
      %p107 = scmp.ne.s32.totalorder %s93, %s94
      %p108 = scmp.eq.s32.totalorder %s34, 1
      %p109 = por %p107, %p108
      %p111 = scmp.ne.s32.totalorder %s94, %s110
      %p112 = scmp.eq.s32.totalorder %s34, 0
      %p113 = por %p111, %p112
      %s114 = ssub.s32 %s28, %s35
      %p115 = scmp.eq.s32.totalorder %s114, 0
      %s117 = sadd.s32 %s116, 1
      %s118 = scalar_select %p115, %s116, %s117
      %p121 = pneg %p115
      %p122 = scmp.eq.s32.totalorder %s28, 1
      %p123 = por %p121, %p122
      %p124 = scmp.ne.s32.totalorder %s116, %s119
      %p125 = scmp.eq.s32.totalorder %s28, 0
      %p126 = por %p124, %p125
      %p127 = scmp.ne.s32.totalorder %s116, %s119
      %p128 = scmp.eq.s32.totalorder %s33, 1
      %p129 = por %p127, %p128
      %p130 = scmp.ne.s32.totalorder %s119, %s120
      %p131 = scmp.eq.s32.totalorder %s33, 0
      %p132 = por %p130, %p131
      %p133 = scmp.ne.s32.totalorder %s119, %s120
      %p134 = scmp.eq.s32.totalorder %s34, 1
      %p135 = por %p133, %p134
      %p137 = scmp.ne.s32.totalorder %s120, %s136
      %p138 = scmp.eq.s32.totalorder %s34, 0
      %p139 = por %p137, %p138
      %s140 = ssub.s32 %s28, %s35
      %p141 = scmp.eq.s32.totalorder %s140, 0
      %s143 = sadd.s32 %s142, 1
      %s144 = scalar_select %p141, %s142, %s143
      %p147 = pneg %p141
      %p148 = scmp.eq.s32.totalorder %s28, 1
      %p149 = por %p147, %p148
      %p150 = scmp.ne.s32.totalorder %s142, %s145
      %p151 = scmp.eq.s32.totalorder %s28, 0
      %p152 = por %p150, %p151
      %p153 = scmp.ne.s32.totalorder %s142, %s145
      %p154 = scmp.eq.s32.totalorder %s33, 1
      %p155 = por %p153, %p154
      %p156 = scmp.ne.s32.totalorder %s145, %s146
      %p157 = scmp.eq.s32.totalorder %s33, 0
      %p158 = por %p156, %p157
      %p159 = scmp.ne.s32.totalorder %s145, %s146
      %p160 = scmp.eq.s32.totalorder %s34, 1
      %p161 = por %p159, %p160
      %p163 = scmp.ne.s32.totalorder %s146, %s162
      %p164 = scmp.eq.s32.totalorder %s34, 0
      %p165 = por %p163, %p164
      %s166 = ssub.s32 %s28, %s35
      %p167 = scmp.eq.s32.totalorder %s166, 0
      %s169 = sadd.s32 %s168, 1
      %s170 = scalar_select %p167, %s168, %s169
      %p173 = pneg %p167
      %p174 = scmp.eq.s32.totalorder %s28, 1
      %p175 = por %p173, %p174
      %p176 = scmp.ne.s32.totalorder %s168, %s171
      %p177 = scmp.eq.s32.totalorder %s28, 0
      %p178 = por %p176, %p177
      %p179 = scmp.ne.s32.totalorder %s168, %s171
      %p180 = scmp.eq.s32.totalorder %s33, 1
      %p181 = por %p179, %p180
      %p182 = scmp.ne.s32.totalorder %s171, %s172
      %p183 = scmp.eq.s32.totalorder %s33, 0
      %p184 = por %p182, %p183
      %p185 = scmp.ne.s32.totalorder %s171, %s172
      %p186 = scmp.eq.s32.totalorder %s34, 1
      %p187 = por %p185, %p186
      %p189 = scmp.ne.s32.totalorder %s172, %s188
      %p190 = scmp.eq.s32.totalorder %s34, 0
      %p191 = por %p189, %p190
      %s192 = ssub.s32 %s28, %s35
      %p193 = scmp.eq.s32.totalorder %s192, 0
      %s195 = sadd.s32 %s194, 1
      %s196 = scalar_select %p193, %s194, %s195
      %p199 = pneg %p193
      %p200 = scmp.eq.s32.totalorder %s28, 1
      %p201 = por %p199, %p200
      %p202 = scmp.ne.s32.totalorder %s194, %s197
      %p203 = scmp.eq.s32.totalorder %s28, 0
      %p204 = por %p202, %p203
      %p205 = scmp.ne.s32.totalorder %s194, %s197
      %p206 = scmp.eq.s32.totalorder %s33, 1
      %p207 = por %p205, %p206
      %p208 = scmp.ne.s32.totalorder %s197, %s198
      %p209 = scmp.eq.s32.totalorder %s33, 0
      %p210 = por %p208, %p209
      %p211 = scmp.ne.s32.totalorder %s197, %s198
      %p212 = scmp.eq.s32.totalorder %s34, 1
      %p213 = por %p211, %p212
      %p215 = scmp.ne.s32.totalorder %s198, %s214
      %p216 = scmp.eq.s32.totalorder %s34, 0
      %p217 = por %p215, %p216
      %p218 = scmp.le.s32.totalorder 1, %s28
      %p219 = scmp.lt.s32.totalorder %s28, 3
      %p220 = pnand %p218, %p219
      %p221 = pneg %p220
      // Predicated region
      $region9: #{tpu_custom_call.1} parent=5 // pred_check
        _
      $region10: #{tpu_custom_call.1} parent=5 // pred_check_branch
        %223 = sbr.rel (%p220) target = $region12
      $region11: #{tpu_custom_call.1} parent=5 // pred_region
        %s224 = ssub.s32 %s28, 1
      $region12: #{tpu_custom_call.1} parent=5 // pred_fallthru
        _
      %p225 = scmp.lt.s32.totalorder %s28, 2
      // Predicated region
      $region13: #{tpu_custom_call.1} parent=5 // pred_check
        %p226 = pneg %p225
      $region14: #{tpu_custom_call.1} parent=5 // pred_check_branch
        %228 = sbr.rel (%p226) target = $region16
      $region15: #{tpu_custom_call.1} parent=5 // pred_region
        // Predicated region
        $region17: #{tpu_custom_call.1} parent=15 // pred_check
          %p229 = pneg %p48
        $region18: #{tpu_custom_call.1} parent=15 // pred_check_branch
          %231 = sbr.rel (%p229) target = $region20
        $region19: #{tpu_custom_call.1} parent=15 // pred_region
          %s232 = sand.u32 %s38, 1
          %s233 = scalar_lea.sflag [#allocation3], %s232
          %s234 = sand.u32 %s38, 1
          %s235 = smul.addr %s234, 16
          %s236 = scalar_lea.vmem [#allocation2], %s235
          %238 = vsyncadd %s233, 0
          %s239 = smul.addr %s28, 8
          %s240 = smul.addr %s239, 2
          %s241 = scalar_lea.hbm %s0, %s240
          %s242 = sshll.u32 %s241, 4
          %s243 = int_to_ptr.hbm [resolvable:$true] %s242
          %s244 = sshll.u32 %s236, 4
          %s245 = int_to_ptr.vmem [resolvable:$true] %s244
          %250 = dma.hbm_to_vmem [thread:$0]  %s243, 256, %s245, %s233, 32, 32, 2
        $region20: #{tpu_custom_call.1} parent=15 // pred_fallthru
          _
        // Predicated region
        $region21: #{tpu_custom_call.1} parent=15 // pred_check
          %p251 = pneg %p74
        $region22: #{tpu_custom_call.1} parent=15 // pred_check_branch
          %253 = sbr.rel (%p251) target = $region24
        $region23: #{tpu_custom_call.1} parent=15 // pred_region
          %s254 = sand.u32 %s28, 1
          %s255 = scalar_lea.sflag [#allocation6], %s254
          %s256 = sand.u32 %s64, 1
          %s257 = smul.addr %s256, 32
          %s258 = scalar_lea.vmem [#allocation5], %s257
          %260 = vsyncadd %s255, 0
          %s261 = smul.addr %s28, 4
          %s262 = smul.addr %s261, 8
          %s263 = scalar_lea.hbm %s1, %s262
          %s264 = sshll.u32 %s263, 4
          %s265 = int_to_ptr.hbm [resolvable:$true] %s264
          %s266 = sshll.u32 %s258, 4
          %s267 = int_to_ptr.vmem [resolvable:$true] %s266
          %272 = dma.hbm_to_vmem [thread:$0]  %s265, 512, %s267, %s255, 128, 128, 8
        $region24: #{tpu_custom_call.1} parent=15 // pred_fallthru
          _
        // Predicated region
        $region25: #{tpu_custom_call.1} parent=15 // pred_check
          %p273 = pneg %p100
        $region26: #{tpu_custom_call.1} parent=15 // pred_check_branch
          %275 = sbr.rel (%p273) target = $region28
        $region27: #{tpu_custom_call.1} parent=15 // pred_region
          %s276 = sand.u32 %s28, 1
          %s277 = scalar_lea.sflag [#allocation6], %s276
          %s278 = sand.u32 %s90, 1
          %s279 = smul.addr %s278, 2
          %s280 = scalar_lea.vmem [#allocation7], %s279
          %282 = vsyncadd %s277, 0
          %s283 = smul.addr %s28, 2
          %s284 = scalar_lea.hbm %s2, %s283
          %s286 = sshll.u32 %s284, 4
          %s287 = int_to_ptr.hbm [resolvable:$true] %s286
          %s288 = sshll.u32 %s280, 4
          %s289 = int_to_ptr.vmem [resolvable:$true] %s288
          %291 = dma.hbm_to_vmem [thread:$0]  %s287, 32, %s289, %s277
        $region28: #{tpu_custom_call.1} parent=15 // pred_fallthru
          _
        // Predicated region
        $region29: #{tpu_custom_call.1} parent=15 // pred_check
          %p292 = pneg %p126
        $region30: #{tpu_custom_call.1} parent=15 // pred_check_branch
          %294 = sbr.rel (%p292) target = $region32
        $region31: #{tpu_custom_call.1} parent=15 // pred_region
          %s295 = sand.u32 %s116, 1
          %s296 = scalar_lea.sflag [#allocation9], %s295
          %s297 = sand.u32 %s116, 1
          %s298 = smul.addr %s297, 2
          %s299 = scalar_lea.vmem [#allocation8], %s298
          %301 = vsyncadd %s296, 0
          %s302 = smul.addr %s28, 2
          %s303 = scalar_lea.hbm %s3, %s302
          %s305 = sshll.u32 %s303, 4
          %s306 = int_to_ptr.hbm [resolvable:$true] %s305
          %s307 = sshll.u32 %s299, 4
          %s308 = int_to_ptr.vmem [resolvable:$true] %s307
          %310 = dma.hbm_to_vmem [thread:$0]  %s306, 32, %s308, %s296
        $region32: #{tpu_custom_call.1} parent=15 // pred_fallthru
          _
      $region16: #{tpu_custom_call.1} parent=5 // pred_fallthru
        _
      %p311 = scmp.le.s32.totalorder 1, %s28
      %p312 = scmp.lt.s32.totalorder %s28, 3
      %p313 = pnand %p311, %p312
      %p314 = pneg %p313
      // Predicated region
      $region33: #{tpu_custom_call.1} parent=5 // pred_check
        _
      $region34: #{tpu_custom_call.1} parent=5 // pred_check_branch
        %316 = sbr.rel (%p313) target = $region36
      $region35: #{tpu_custom_call.1} parent=5 // pred_region
        %s317 = ssub.s32 %s28, 1
        %s318 = sand.u32 %s41, 1
        %s319 = scalar_lea.sflag [#allocation3], %s318
        %s320 = sand.u32 %s41, 1
        %s321 = smul.addr %s320, 16
        %s322 = scalar_lea.vmem [#allocation2], %s321
        // Predicated region
        $region37: #{tpu_custom_call.1} parent=35 // pred_check
          %p323 = pneg %p54
        $region38: #{tpu_custom_call.1} parent=35 // pred_check_branch
          %325 = sbr.rel (%p323) target = $region40
        $region39: #{tpu_custom_call.1} parent=35 // pred_region
          %327 = dma.done %s319, 256
        $region40: #{tpu_custom_call.1} parent=35 // pred_fallthru
          _
        %s328 = sand.u32 %s33, 1
        %s329 = scalar_lea.sflag [#allocation6], %s328
        %s330 = sand.u32 %s67, 1
        %s331 = smul.addr %s330, 32
        %s332 = scalar_lea.vmem [#allocation5], %s331
        // Predicated region
        $region41: #{tpu_custom_call.1} parent=35 // pred_check
          %p333 = pneg %p80
        $region42: #{tpu_custom_call.1} parent=35 // pred_check_branch
          %335 = sbr.rel (%p333) target = $region44
        $region43: #{tpu_custom_call.1} parent=35 // pred_region
          %337 = dma.done %s329, 512
        $region44: #{tpu_custom_call.1} parent=35 // pred_fallthru
          _
        %s338 = sand.u32 %s33, 1
        %s339 = scalar_lea.sflag [#allocation6], %s338
        %s340 = sand.u32 %s93, 1
        %s341 = smul.addr %s340, 2
        %s342 = scalar_lea.vmem [#allocation7], %s341
        // Predicated region
        $region45: #{tpu_custom_call.1} parent=35 // pred_check
          %p343 = pneg %p106
        $region46: #{tpu_custom_call.1} parent=35 // pred_check_branch
          %345 = sbr.rel (%p343) target = $region48
        $region47: #{tpu_custom_call.1} parent=35 // pred_region
          %347 = dma.done %s339, 32
        $region48: #{tpu_custom_call.1} parent=35 // pred_fallthru
          _
        %s348 = sand.u32 %s119, 1
        %s349 = scalar_lea.sflag [#allocation9], %s348
        %s350 = sand.u32 %s119, 1
        %s351 = smul.addr %s350, 2
        %s352 = scalar_lea.vmem [#allocation8], %s351
        // Predicated region
        $region49: #{tpu_custom_call.1} parent=35 // pred_check
          %p353 = pneg %p132
        $region50: #{tpu_custom_call.1} parent=35 // pred_check_branch
          %355 = sbr.rel (%p353) target = $region52
        $region51: #{tpu_custom_call.1} parent=35 // pred_region
          %357 = dma.done %s349, 32
        $region52: #{tpu_custom_call.1} parent=35 // pred_fallthru
          _
        %s358 = sand.u32 %s41, 1
        %s359 = scalar_lea.sflag [#allocation3], %s358
        %s360 = sand.u32 %s41, 1
        %s361 = smul.addr %s360, 16
        %s362 = scalar_lea.vmem [#allocation2], %s361
        %p363 = pneg %p54
        %p364 = pneg %p51
        %s365 = sand.u32 %s33, 1
        %s366 = scalar_lea.sflag [#allocation6], %s365
        %s367 = sand.u32 %s67, 1
        %s368 = smul.addr %s367, 32
        %s369 = scalar_lea.vmem [#allocation5], %s368
        %p370 = pneg %p80
        %p371 = pneg %p77
        %s372 = sand.u32 %s33, 1
        %s373 = scalar_lea.sflag [#allocation6], %s372
        %s374 = sand.u32 %s93, 1
        %s375 = smul.addr %s374, 2
        %s376 = scalar_lea.vmem [#allocation7], %s375
        %p377 = pneg %p106
        %p378 = pneg %p103
        %s379 = sand.u32 %s119, 1
        %s380 = scalar_lea.sflag [#allocation9], %s379
        %s381 = sand.u32 %s119, 1
        %s382 = smul.addr %s381, 2
        %s383 = scalar_lea.vmem [#allocation8], %s382
        %p384 = pneg %p132
        %p385 = pneg %p129
        %p386 = pneg %p158
        %p387 = pneg %p155
        %s388 = sand.u32 %s145, 1
        %s389 = scalar_lea.sflag [#allocation4], %s388
        %s390 = sand.u32 %s145, 1
        %s391 = smul.addr %s390, 16
        %s392 = scalar_lea.vmem [#allocation10], %s391
        %p393 = pneg %p184
        %p394 = pneg %p181
        %s395 = sand.u32 %s33, 1
        %s396 = scalar_lea.sflag [#allocation12], %s395
        %s397 = sand.u32 %s171, 1
        %s398 = smul.addr %s397, 2
        %s399 = scalar_lea.vmem [#allocation11], %s398
        %p400 = pneg %p210
        %p401 = pneg %p207
        %s402 = sand.u32 %s33, 1
        %s403 = scalar_lea.sflag [#allocation12], %s402
        %s404 = sand.u32 %s197, 1
        %s405 = smul.addr %s404, 2
        %s406 = scalar_lea.vmem [#allocation13], %s405
        %v407 = vld [vmem:[%s342] sm:$0x3]
        %vm408 = vcmask 254976
        %409 = vst.msk [vmem:[%s399] sm:$0x3] %vm408, %v407
        %v410 = vld [vmem:[%s352] sm:$0x3]
        %411 = vst.msk [vmem:[%s406] sm:$0x3] %vm408, %v410
        %v412 = vld [vmem:[%s332] sm:$0xff]
        %v413 = vld [vmem:[%s332 + $0x8] sm:$0xff]
        %v414 = vld [vmem:[%s332 + $0x10] sm:$0xff]
        %v415 = vld [vmem:[%s332 + $0x18] sm:$0xff]
        %s416 = smul.u32 %s33, 7
        %s417 = smul.u32 %s416, 2
        %s418 = scalar_lea.vmem %s322, %s417 [#allocation2]
        %v419 = vld [vmem:[%s418] sm:$0x3]
        %v420 = vld [vmem:[%s399] sm:$0x3]
        %vm421 = vcmask 261120
        %v423 = vsel %vm421, %v420, 0
        %425 = vmatpush.msra.mxu0 0.0
        %426 = vmatpush.msra.mxu0 0.0
        %427 = vmatpush.msra.mxu0 0.0
        %428 = vmatpush.msra.mxu0 0.0
        %429 = vmatpush.msra.mxu0 0.0
        %430 = vmatpush.msra.mxu0 0.0
        %431 = vmatpush.msra.mxu0 0.0
        %432 = vmatpush.msra.mxu0 0.0
        %433 = vmatpush.msra.mxu0 0.0
        %434 = vmatpush.msra.mxu0 0.0
        %435 = vmatpush.msra.mxu0 0.0
        %436 = vmatpush.msra.mxu0 0.0
        %437 = vmatpush.msra.mxu0 %v415
        %438 = vmatpush.msra.mxu0 %v414
        %439 = vmatpush.msra.mxu0 %v413
        %440 = vmatpush.msra.mxu0 %v412
        %441 = vmatmul.f32.gmra.mxu0 %v423
        %v442 = vpop.f32.mrf.mxu0
        %v443 = vadd.f32 0.0, %v442
        %444 = vdwg.mxu0
        %v445 = vadd.f32 %v419, %v443
        %v446 = vxor.u32 %v445, 2147483648
        %v447 = vmul.f32 %v446, 1.442695
        %v448 = vpow.pop %v447
        %v449 = vadd.f32 %v448, 1.0
        %v450 = vrcp.pop %v449
        %v451 = vmul.f32 %v449, %v450
        %v452 = vsub.f32 1.0, %v451
        %v453 = vmul.f32 %v450, %v452
        %v454 = vadd.f32 %v450, %v453
        %vm455 = vweird.f32 %v449
        %vm456 = vweird.f32 %v450
        %vm457 = vmor %vm455, %vm456
        %v458 = vsel %vm457, %v450, %v454
        %v459 = vand.u32 2147483647, %v449
        %vm460 = vcmp.eq.f32.partialorder %v459, 8.507059e+37
        %v461 = vand.u32 %v449, 2147483648
        %v462 = vor.u32 1.1754944e-38, %v461
        %v463 = vsel %vm460, %v462, %v458
        %v464 = vmul.f32 1.0, %v463
        %v465 = vtanh.pop %v445
        %v466 = vld [vmem:[%s406] sm:$0x3]
        %468 = vrot.lane.b32.xlu0 %v466, 32
        %v469 = vpop.permute.xlu0 %468
        %v471 = vmul.f32 %v464, %v469
        %473 = vrot.lane.b32.xlu0 %v465, 64
        %v474 = vpop.permute.xlu0 %473
        %v476 = vmul.f32 %v464, %v474
        %478 = vrot.lane.b32.xlu0 %v476, 32
        %v479 = vpop.permute.xlu0 %478
        %v481 = vadd.f32 %v471, %v479
        %v482 = vtanh.pop %v481
        %484 = vrot.lane.b32.xlu0 %v482, 64
        %v485 = vpop.permute.xlu0 %484
        %v487 = vmul.f32 %v464, %v485
        %489 = vrot.lane.b32.xlu0 %v481, 96
        %v490 = vpop.permute.xlu0 %489
        %492 = vst.msk [vmem:[%s406] sm:$0x3] %vm408, %v490
        %494 = vrot.lane.b32.xlu0 %v487, 32
        %v495 = vpop.permute.xlu0 %494
        %497 = vst.msk [vmem:[%s399] sm:$0x3] %vm408, %v495
        %s498 = scalar_lea.vmem %s392, %s417 [#allocation10]
        %499 = vst.msk [vmem:[%s498] sm:$0x3] %vm408, %v495
        %s500 = smul.u32 %s33, 5
        %s501 = sadd.s32 %s500, 1
        %s502 = smul.u32 %s501, 2
        %s503 = scalar_lea.vmem %s322, %s502 [#allocation2]
        %v504 = vld [vmem:[%s503] sm:$0x3]
        %v505 = vld [vmem:[%s399] sm:$0x3]
        %v507 = vsel %vm421, %v505, 0
        %509 = vmatpush.msra.mxu0 0.0
        %510 = vmatpush.msra.mxu0 0.0
        %511 = vmatpush.msra.mxu0 0.0
        %512 = vmatpush.msra.mxu0 0.0
        %513 = vmatpush.msra.mxu0 0.0
        %514 = vmatpush.msra.mxu0 0.0
        %515 = vmatpush.msra.mxu0 0.0
        %516 = vmatpush.msra.mxu0 0.0
        %517 = vmatpush.msra.mxu0 0.0
        %518 = vmatpush.msra.mxu0 0.0
        %519 = vmatpush.msra.mxu0 0.0
        %520 = vmatpush.msra.mxu0 0.0
        %521 = vmatpush.msra.mxu0 %v415
        %522 = vmatpush.msra.mxu0 %v414
        %523 = vmatpush.msra.mxu0 %v413
        %524 = vmatpush.msra.mxu0 %v412
        %525 = vmatmul.f32.gmra.mxu0 %v507
        %v526 = vpop.f32.mrf.mxu0
        %v527 = vadd.f32 0.0, %v526
        %528 = vdwg.mxu0
        %v529 = vadd.f32 %v504, %v527
        %v530 = vxor.u32 %v529, 2147483648
        %v531 = vmul.f32 %v530, 1.442695
        %v532 = vpow.pop %v531
        %v533 = vadd.f32 %v532, 1.0
        %v534 = vrcp.pop %v533
        %v535 = vmul.f32 %v533, %v534
        %v536 = vsub.f32 1.0, %v535
        %v537 = vmul.f32 %v534, %v536
        %v538 = vadd.f32 %v534, %v537
        %vm539 = vweird.f32 %v533
        %vm540 = vweird.f32 %v534
        %vm541 = vmor %vm539, %vm540
        %v542 = vsel %vm541, %v534, %v538
        %v543 = vand.u32 2147483647, %v533
        %vm544 = vcmp.eq.f32.partialorder %v543, 8.507059e+37
        %v545 = vand.u32 %v533, 2147483648
        %v546 = vor.u32 1.1754944e-38, %v545
        %v547 = vsel %vm544, %v546, %v542
        %v548 = vmul.f32 1.0, %v547
        %v549 = vtanh.pop %v529
        %v550 = vld [vmem:[%s406] sm:$0x3]
        %552 = vrot.lane.b32.xlu0 %v550, 32
        %v553 = vpop.permute.xlu0 %552
        %v555 = vmul.f32 %v548, %v553
        %557 = vrot.lane.b32.xlu0 %v549, 64
        %v558 = vpop.permute.xlu0 %557
        %v560 = vmul.f32 %v548, %v558
        %562 = vrot.lane.b32.xlu0 %v560, 32
        %v563 = vpop.permute.xlu0 %562
        %v565 = vadd.f32 %v555, %v563
        %v566 = vtanh.pop %v565
        %568 = vrot.lane.b32.xlu0 %v566, 64
        %v569 = vpop.permute.xlu0 %568
        %v571 = vmul.f32 %v548, %v569
        %573 = vrot.lane.b32.xlu0 %v565, 96
        %v574 = vpop.permute.xlu0 %573
        %576 = vst.msk [vmem:[%s406] sm:$0x3] %vm408, %v574
        %578 = vrot.lane.b32.xlu0 %v571, 32
        %v579 = vpop.permute.xlu0 %578
        %581 = vst.msk [vmem:[%s399] sm:$0x3] %vm408, %v579
        %s582 = scalar_lea.vmem %s392, %s502 [#allocation10]
        %583 = vst.msk [vmem:[%s582] sm:$0x3] %vm408, %v579
        %s584 = smul.u32 %s33, 3
        %s585 = sadd.s32 %s584, 2
        %s586 = smul.u32 %s585, 2
        %s587 = scalar_lea.vmem %s322, %s586 [#allocation2]
        %v588 = vld [vmem:[%s587] sm:$0x3]
        %v589 = vld [vmem:[%s399] sm:$0x3]
        %v591 = vsel %vm421, %v589, 0
        %593 = vmatpush.msra.mxu0 0.0
        %594 = vmatpush.msra.mxu0 0.0
        %595 = vmatpush.msra.mxu0 0.0
        %596 = vmatpush.msra.mxu0 0.0
        %597 = vmatpush.msra.mxu0 0.0
        %598 = vmatpush.msra.mxu0 0.0
        %599 = vmatpush.msra.mxu0 0.0
        %600 = vmatpush.msra.mxu0 0.0
        %601 = vmatpush.msra.mxu0 0.0
        %602 = vmatpush.msra.mxu0 0.0
        %603 = vmatpush.msra.mxu0 0.0
        %604 = vmatpush.msra.mxu0 0.0
        %605 = vmatpush.msra.mxu0 %v415
        %606 = vmatpush.msra.mxu0 %v414
        %607 = vmatpush.msra.mxu0 %v413
        %608 = vmatpush.msra.mxu0 %v412
        %609 = vmatmul.f32.gmra.mxu0 %v591
        %v610 = vpop.f32.mrf.mxu0
        %v611 = vadd.f32 0.0, %v610
        %612 = vdwg.mxu0
        %v613 = vadd.f32 %v588, %v611
        %v614 = vxor.u32 %v613, 2147483648
        %v615 = vmul.f32 %v614, 1.442695
        %v616 = vpow.pop %v615
        %v617 = vadd.f32 %v616, 1.0
        %v618 = vrcp.pop %v617
        %v619 = vmul.f32 %v617, %v618
        %v620 = vsub.f32 1.0, %v619
        %v621 = vmul.f32 %v618, %v620
        %v622 = vadd.f32 %v618, %v621
        %vm623 = vweird.f32 %v617
        %vm624 = vweird.f32 %v618
        %vm625 = vmor %vm623, %vm624
        %v626 = vsel %vm625, %v618, %v622
        %v627 = vand.u32 2147483647, %v617
        %vm628 = vcmp.eq.f32.partialorder %v627, 8.507059e+37
        %v629 = vand.u32 %v617, 2147483648
        %v630 = vor.u32 1.1754944e-38, %v629
        %v631 = vsel %vm628, %v630, %v626
        %v632 = vmul.f32 1.0, %v631
        %v633 = vtanh.pop %v613
        %v634 = vld [vmem:[%s406] sm:$0x3]
        %636 = vrot.lane.b32.xlu0 %v634, 32
        %v637 = vpop.permute.xlu0 %636
        %v639 = vmul.f32 %v632, %v637
        %641 = vrot.lane.b32.xlu0 %v633, 64
        %v642 = vpop.permute.xlu0 %641
        %v644 = vmul.f32 %v632, %v642
        %646 = vrot.lane.b32.xlu0 %v644, 32
        %v647 = vpop.permute.xlu0 %646
        %v649 = vadd.f32 %v639, %v647
        %v650 = vtanh.pop %v649
        %652 = vrot.lane.b32.xlu0 %v650, 64
        %v653 = vpop.permute.xlu0 %652
        %v655 = vmul.f32 %v632, %v653
        %657 = vrot.lane.b32.xlu0 %v649, 96
        %v658 = vpop.permute.xlu0 %657
        %660 = vst.msk [vmem:[%s406] sm:$0x3] %vm408, %v658
        %662 = vrot.lane.b32.xlu0 %v655, 32
        %v663 = vpop.permute.xlu0 %662
        %665 = vst.msk [vmem:[%s399] sm:$0x3] %vm408, %v663
        %s666 = scalar_lea.vmem %s392, %s586 [#allocation10]
        %667 = vst.msk [vmem:[%s666] sm:$0x3] %vm408, %v663
        %s668 = sadd.s32 %s33, 3
        %s669 = smul.u32 %s668, 2
        %s670 = scalar_lea.vmem %s322, %s669 [#allocation2]
        %v671 = vld [vmem:[%s670] sm:$0x3]
        %v672 = vld [vmem:[%s399] sm:$0x3]
        %v674 = vsel %vm421, %v672, 0
        %676 = vmatpush.msra.mxu0 0.0
        %677 = vmatpush.msra.mxu0 0.0
        %678 = vmatpush.msra.mxu0 0.0
        %679 = vmatpush.msra.mxu0 0.0
        %680 = vmatpush.msra.mxu0 0.0
        %681 = vmatpush.msra.mxu0 0.0
        %682 = vmatpush.msra.mxu0 0.0
        %683 = vmatpush.msra.mxu0 0.0
        %684 = vmatpush.msra.mxu0 0.0
        %685 = vmatpush.msra.mxu0 0.0
        %686 = vmatpush.msra.mxu0 0.0
        %687 = vmatpush.msra.mxu0 0.0
        %688 = vmatpush.msra.mxu0 %v415
        %689 = vmatpush.msra.mxu0 %v414
        %690 = vmatpush.msra.mxu0 %v413
        %691 = vmatpush.msra.mxu0 %v412
        %692 = vmatmul.f32.gmra.mxu0 %v674
        %v693 = vpop.f32.mrf.mxu0
        %v694 = vadd.f32 0.0, %v693
        %695 = vdwg.mxu0
        %v696 = vadd.f32 %v671, %v694
        %v697 = vxor.u32 %v696, 2147483648
        %v698 = vmul.f32 %v697, 1.442695
        %v699 = vpow.pop %v698
        %v700 = vadd.f32 %v699, 1.0
        %v701 = vrcp.pop %v700
        %v702 = vmul.f32 %v700, %v701
        %v703 = vsub.f32 1.0, %v702
        %v704 = vmul.f32 %v701, %v703
        %v705 = vadd.f32 %v701, %v704
        %vm706 = vweird.f32 %v700
        %vm707 = vweird.f32 %v701
        %vm708 = vmor %vm706, %vm707
        %v709 = vsel %vm708, %v701, %v705
        %v710 = vand.u32 2147483647, %v700
        %vm711 = vcmp.eq.f32.partialorder %v710, 8.507059e+37
        %v712 = vand.u32 %v700, 2147483648
        %v713 = vor.u32 1.1754944e-38, %v712
        %v714 = vsel %vm711, %v713, %v709
        %v715 = vmul.f32 1.0, %v714
        %v716 = vtanh.pop %v696
        %v717 = vld [vmem:[%s406] sm:$0x3]
        %719 = vrot.lane.b32.xlu0 %v717, 32
        %v720 = vpop.permute.xlu0 %719
        %v722 = vmul.f32 %v715, %v720
        %724 = vrot.lane.b32.xlu0 %v716, 64
        %v725 = vpop.permute.xlu0 %724
        %v727 = vmul.f32 %v715, %v725
        %729 = vrot.lane.b32.xlu0 %v727, 32
        %v730 = vpop.permute.xlu0 %729
        %v732 = vadd.f32 %v722, %v730
        %v733 = vtanh.pop %v732
        %735 = vrot.lane.b32.xlu0 %v733, 64
        %v736 = vpop.permute.xlu0 %735
        %v738 = vmul.f32 %v715, %v736
        %740 = vrot.lane.b32.xlu0 %v732, 96
        %v741 = vpop.permute.xlu0 %740
        %743 = vst.msk [vmem:[%s406] sm:$0x3] %vm408, %v741
        %745 = vrot.lane.b32.xlu0 %v738, 32
        %v746 = vpop.permute.xlu0 %745
        %748 = vst.msk [vmem:[%s399] sm:$0x3] %vm408, %v746
        %s749 = scalar_lea.vmem %s392, %s669 [#allocation10]
        %750 = vst.msk [vmem:[%s749] sm:$0x3] %vm408, %v746
        %s751 = ssub.s32 4, %s33
        %s752 = smul.u32 %s751, 2
        %s753 = scalar_lea.vmem %s322, %s752 [#allocation2]
        %v754 = vld [vmem:[%s753] sm:$0x3]
        %v755 = vld [vmem:[%s399] sm:$0x3]
        %v757 = vsel %vm421, %v755, 0
        %759 = vmatpush.msra.mxu0 0.0
        %760 = vmatpush.msra.mxu0 0.0
        %761 = vmatpush.msra.mxu0 0.0
        %762 = vmatpush.msra.mxu0 0.0
        %763 = vmatpush.msra.mxu0 0.0
        %764 = vmatpush.msra.mxu0 0.0
        %765 = vmatpush.msra.mxu0 0.0
        %766 = vmatpush.msra.mxu0 0.0
        %767 = vmatpush.msra.mxu0 0.0
        %768 = vmatpush.msra.mxu0 0.0
        %769 = vmatpush.msra.mxu0 0.0
        %770 = vmatpush.msra.mxu0 0.0
        %771 = vmatpush.msra.mxu0 %v415
        %772 = vmatpush.msra.mxu0 %v414
        %773 = vmatpush.msra.mxu0 %v413
        %774 = vmatpush.msra.mxu0 %v412
        %775 = vmatmul.f32.gmra.mxu0 %v757
        %v776 = vpop.f32.mrf.mxu0
        %v777 = vadd.f32 0.0, %v776
        %778 = vdwg.mxu0
        %v779 = vadd.f32 %v754, %v777
        %v780 = vxor.u32 %v779, 2147483648
        %v781 = vmul.f32 %v780, 1.442695
        %v782 = vpow.pop %v781
        %v783 = vadd.f32 %v782, 1.0
        %v784 = vrcp.pop %v783
        %v785 = vmul.f32 %v783, %v784
        %v786 = vsub.f32 1.0, %v785
        %v787 = vmul.f32 %v784, %v786
        %v788 = vadd.f32 %v784, %v787
        %vm789 = vweird.f32 %v783
        %vm790 = vweird.f32 %v784
        %vm791 = vmor %vm789, %vm790
        %v792 = vsel %vm791, %v784, %v788
        %v793 = vand.u32 2147483647, %v783
        %vm794 = vcmp.eq.f32.partialorder %v793, 8.507059e+37
        %v795 = vand.u32 %v783, 2147483648
        %v796 = vor.u32 1.1754944e-38, %v795
        %v797 = vsel %vm794, %v796, %v792
        %v798 = vmul.f32 1.0, %v797
        %v799 = vtanh.pop %v779
        %v800 = vld [vmem:[%s406] sm:$0x3]
        %802 = vrot.lane.b32.xlu0 %v800, 32
        %v803 = vpop.permute.xlu0 %802
        %v805 = vmul.f32 %v798, %v803
        %807 = vrot.lane.b32.xlu0 %v799, 64
        %v808 = vpop.permute.xlu0 %807
        %v810 = vmul.f32 %v798, %v808
        %812 = vrot.lane.b32.xlu0 %v810, 32
        %v813 = vpop.permute.xlu0 %812
        %v815 = vadd.f32 %v805, %v813
        %v816 = vtanh.pop %v815
        %818 = vrot.lane.b32.xlu0 %v816, 64
        %v819 = vpop.permute.xlu0 %818
        %v821 = vmul.f32 %v798, %v819
        %823 = vrot.lane.b32.xlu0 %v815, 96
        %v824 = vpop.permute.xlu0 %823
        %826 = vst.msk [vmem:[%s406] sm:$0x3] %vm408, %v824
        %828 = vrot.lane.b32.xlu0 %v821, 32
        %v829 = vpop.permute.xlu0 %828
        %831 = vst.msk [vmem:[%s399] sm:$0x3] %vm408, %v829
        %s832 = scalar_lea.vmem %s392, %s752 [#allocation10]
        %833 = vst.msk [vmem:[%s832] sm:$0x3] %vm408, %v829
        %s834 = smul.u32 %s33, 4294967293
        %s835 = sadd.s32 %s834, 5
        %s836 = smul.u32 %s835, 2
        %s837 = scalar_lea.vmem %s322, %s836 [#allocation2]
        %v838 = vld [vmem:[%s837] sm:$0x3]
        %v839 = vld [vmem:[%s399] sm:$0x3]
        %v841 = vsel %vm421, %v839, 0
        %843 = vmatpush.msra.mxu0 0.0
        %844 = vmatpush.msra.mxu0 0.0
        %845 = vmatpush.msra.mxu0 0.0
        %846 = vmatpush.msra.mxu0 0.0
        %847 = vmatpush.msra.mxu0 0.0
        %848 = vmatpush.msra.mxu0 0.0
        %849 = vmatpush.msra.mxu0 0.0
        %850 = vmatpush.msra.mxu0 0.0
        %851 = vmatpush.msra.mxu0 0.0
        %852 = vmatpush.msra.mxu0 0.0
        %853 = vmatpush.msra.mxu0 0.0
        %854 = vmatpush.msra.mxu0 0.0
        %855 = vmatpush.msra.mxu0 %v415
        %856 = vmatpush.msra.mxu0 %v414
        %857 = vmatpush.msra.mxu0 %v413
        %858 = vmatpush.msra.mxu0 %v412
        %859 = vmatmul.f32.gmra.mxu0 %v841
        %v860 = vpop.f32.mrf.mxu0
        %v861 = vadd.f32 0.0, %v860
        %862 = vdwg.mxu0
        %v863 = vadd.f32 %v838, %v861
        %v864 = vxor.u32 %v863, 2147483648
        %v865 = vmul.f32 %v864, 1.442695
        %v866 = vpow.pop %v865
        %v867 = vadd.f32 %v866, 1.0
        %v868 = vrcp.pop %v867
        %v869 = vmul.f32 %v867, %v868
        %v870 = vsub.f32 1.0, %v869
        %v871 = vmul.f32 %v868, %v870
        %v872 = vadd.f32 %v868, %v871
        %vm873 = vweird.f32 %v867
        %vm874 = vweird.f32 %v868
        %vm875 = vmor %vm873, %vm874
        %v876 = vsel %vm875, %v868, %v872
        %v877 = vand.u32 2147483647, %v867
        %vm878 = vcmp.eq.f32.partialorder %v877, 8.507059e+37
        %v879 = vand.u32 %v867, 2147483648
        %v880 = vor.u32 1.1754944e-38, %v879
        %v881 = vsel %vm878, %v880, %v876
        %v882 = vmul.f32 1.0, %v881
        %v883 = vtanh.pop %v863
        %v884 = vld [vmem:[%s406] sm:$0x3]
        %886 = vrot.lane.b32.xlu0 %v884, 32
        %v887 = vpop.permute.xlu0 %886
        %v889 = vmul.f32 %v882, %v887
        %891 = vrot.lane.b32.xlu0 %v883, 64
        %v892 = vpop.permute.xlu0 %891
        %v894 = vmul.f32 %v882, %v892
        %896 = vrot.lane.b32.xlu0 %v894, 32
        %v897 = vpop.permute.xlu0 %896
        %v899 = vadd.f32 %v889, %v897
        %v900 = vtanh.pop %v899
        %902 = vrot.lane.b32.xlu0 %v900, 64
        %v903 = vpop.permute.xlu0 %902
        %v905 = vmul.f32 %v882, %v903
        %907 = vrot.lane.b32.xlu0 %v899, 96
        %v908 = vpop.permute.xlu0 %907
        %910 = vst.msk [vmem:[%s406] sm:$0x3] %vm408, %v908
        %912 = vrot.lane.b32.xlu0 %v905, 32
        %v913 = vpop.permute.xlu0 %912
        %915 = vst.msk [vmem:[%s399] sm:$0x3] %vm408, %v913
        %s916 = scalar_lea.vmem %s392, %s836 [#allocation10]
        %917 = vst.msk [vmem:[%s916] sm:$0x3] %vm408, %v913
        %s918 = smul.u32 %s33, 4294967291
        %s919 = sadd.s32 %s918, 6
        %s920 = smul.u32 %s919, 2
        %s921 = scalar_lea.vmem %s322, %s920 [#allocation2]
        %v922 = vld [vmem:[%s921] sm:$0x3]
        %v923 = vld [vmem:[%s399] sm:$0x3]
        %v925 = vsel %vm421, %v923, 0
        %927 = vmatpush.msra.mxu0 0.0
        %928 = vmatpush.msra.mxu0 0.0
        %929 = vmatpush.msra.mxu0 0.0
        %930 = vmatpush.msra.mxu0 0.0
        %931 = vmatpush.msra.mxu0 0.0
        %932 = vmatpush.msra.mxu0 0.0
        %933 = vmatpush.msra.mxu0 0.0
        %934 = vmatpush.msra.mxu0 0.0
        %935 = vmatpush.msra.mxu0 0.0
        %936 = vmatpush.msra.mxu0 0.0
        %937 = vmatpush.msra.mxu0 0.0
        %938 = vmatpush.msra.mxu0 0.0
        %939 = vmatpush.msra.mxu0 %v415
        %940 = vmatpush.msra.mxu0 %v414
        %941 = vmatpush.msra.mxu0 %v413
        %942 = vmatpush.msra.mxu0 %v412
        %943 = vmatmul.f32.gmra.mxu0 %v925
        %v944 = vpop.f32.mrf.mxu0
        %v945 = vadd.f32 0.0, %v944
        %946 = vdwg.mxu0
        %v947 = vadd.f32 %v922, %v945
        %v948 = vxor.u32 %v947, 2147483648
        %v949 = vmul.f32 %v948, 1.442695
        %v950 = vpow.pop %v949
        %v951 = vadd.f32 %v950, 1.0
        %v952 = vrcp.pop %v951
        %v953 = vmul.f32 %v951, %v952
        %v954 = vsub.f32 1.0, %v953
        %v955 = vmul.f32 %v952, %v954
        %v956 = vadd.f32 %v952, %v955
        %vm957 = vweird.f32 %v951
        %vm958 = vweird.f32 %v952
        %vm959 = vmor %vm957, %vm958
        %v960 = vsel %vm959, %v952, %v956
        %v961 = vand.u32 2147483647, %v951
        %vm962 = vcmp.eq.f32.partialorder %v961, 8.507059e+37
        %v963 = vand.u32 %v951, 2147483648
        %v964 = vor.u32 1.1754944e-38, %v963
        %v965 = vsel %vm962, %v964, %v960
        %v966 = vmul.f32 1.0, %v965
        %v967 = vtanh.pop %v947
        %v968 = vld [vmem:[%s406] sm:$0x3]
        %970 = vrot.lane.b32.xlu0 %v968, 32
        %v971 = vpop.permute.xlu0 %970
        %v973 = vmul.f32 %v966, %v971
        %975 = vrot.lane.b32.xlu0 %v967, 64
        %v976 = vpop.permute.xlu0 %975
        %v978 = vmul.f32 %v966, %v976
        %980 = vrot.lane.b32.xlu0 %v978, 32
        %v981 = vpop.permute.xlu0 %980
        %v983 = vadd.f32 %v973, %v981
        %v984 = vtanh.pop %v983
        %986 = vrot.lane.b32.xlu0 %v984, 64
        %v987 = vpop.permute.xlu0 %986
        %v989 = vmul.f32 %v966, %v987
        %991 = vrot.lane.b32.xlu0 %v983, 96
        %v992 = vpop.permute.xlu0 %991
        %994 = vst.msk [vmem:[%s406] sm:$0x3] %vm408, %v992
        %996 = vrot.lane.b32.xlu0 %v989, 32
        %v997 = vpop.permute.xlu0 %996
        %999 = vst.msk [vmem:[%s399] sm:$0x3] %vm408, %v997
        %s1000 = scalar_lea.vmem %s392, %s920 [#allocation10]
        %1001 = vst.msk [vmem:[%s1000] sm:$0x3] %vm408, %v997
        %s1002 = smul.u32 %s33, 4294967289
        %s1003 = sadd.s32 %s1002, 7
        %s1004 = smul.u32 %s1003, 2
        %s1005 = scalar_lea.vmem %s322, %s1004 [#allocation2]
        %v1006 = vld [vmem:[%s1005] sm:$0x3]
        %v1007 = vld [vmem:[%s399] sm:$0x3]
        %v1009 = vsel %vm421, %v1007, 0
        %1011 = vmatpush.msra.mxu0 0.0
        %1012 = vmatpush.msra.mxu0 0.0
        %1013 = vmatpush.msra.mxu0 0.0
        %1014 = vmatpush.msra.mxu0 0.0
        %1015 = vmatpush.msra.mxu0 0.0
        %1016 = vmatpush.msra.mxu0 0.0
        %1017 = vmatpush.msra.mxu0 0.0
        %1018 = vmatpush.msra.mxu0 0.0
        %1019 = vmatpush.msra.mxu0 0.0
        %1020 = vmatpush.msra.mxu0 0.0
        %1021 = vmatpush.msra.mxu0 0.0
        %1022 = vmatpush.msra.mxu0 0.0
        %1023 = vmatpush.msra.mxu0 %v415
        %1024 = vmatpush.msra.mxu0 %v414
        %1025 = vmatpush.msra.mxu0 %v413
        %1026 = vmatpush.msra.mxu0 %v412
        %1027 = vmatmul.f32.gmra.mxu0 %v1009
        %v1028 = vpop.f32.mrf.mxu0
        %v1029 = vadd.f32 0.0, %v1028
        %1030 = vdwg.mxu0
        %v1031 = vadd.f32 %v1006, %v1029
        %v1032 = vxor.u32 %v1031, 2147483648
        %v1033 = vmul.f32 %v1032, 1.442695
        %v1034 = vpow.pop %v1033
        %v1035 = vadd.f32 %v1034, 1.0
        %v1036 = vrcp.pop %v1035
        %v1037 = vmul.f32 %v1035, %v1036
        %v1038 = vsub.f32 1.0, %v1037
        %v1039 = vmul.f32 %v1036, %v1038
        %v1040 = vadd.f32 %v1036, %v1039
        %vm1041 = vweird.f32 %v1035
        %vm1042 = vweird.f32 %v1036
        %vm1043 = vmor %vm1041, %vm1042
        %v1044 = vsel %vm1043, %v1036, %v1040
        %v1045 = vand.u32 2147483647, %v1035
        %vm1046 = vcmp.eq.f32.partialorder %v1045, 8.507059e+37
        %v1047 = vand.u32 %v1035, 2147483648
        %v1048 = vor.u32 1.1754944e-38, %v1047
        %v1049 = vsel %vm1046, %v1048, %v1044
        %v1050 = vmul.f32 1.0, %v1049
        %v1051 = vtanh.pop %v1031
        %v1052 = vld [vmem:[%s406] sm:$0x3]
        %1054 = vrot.lane.b32.xlu0 %v1052, 32
        %v1055 = vpop.permute.xlu0 %1054
        %v1057 = vmul.f32 %v1050, %v1055
        %1059 = vrot.lane.b32.xlu0 %v1051, 64
        %v1060 = vpop.permute.xlu0 %1059
        %v1062 = vmul.f32 %v1050, %v1060
        %1064 = vrot.lane.b32.xlu0 %v1062, 32
        %v1065 = vpop.permute.xlu0 %1064
        %v1067 = vadd.f32 %v1057, %v1065
        %v1068 = vtanh.pop %v1067
        %1070 = vrot.lane.b32.xlu0 %v1068, 64
        %v1071 = vpop.permute.xlu0 %1070
        %v1073 = vmul.f32 %v1050, %v1071
        %1075 = vrot.lane.b32.xlu0 %v1067, 96
        %v1076 = vpop.permute.xlu0 %1075
        %1078 = vst.msk [vmem:[%s406] sm:$0x3] %vm408, %v1076
        %1080 = vrot.lane.b32.xlu0 %v1073, 32
        %v1081 = vpop.permute.xlu0 %1080
        %1083 = vst.msk [vmem:[%s399] sm:$0x3] %vm408, %v1081
        %s1084 = scalar_lea.vmem %s392, %s1004 [#allocation10]
        %1085 = vst.msk [vmem:[%s1084] sm:$0x3] %vm408, %v1081
        %s1086 = sand.u32 %s145, 1
        %s1087 = scalar_lea.sflag [#allocation4], %s1086
        %s1088 = sand.u32 %s145, 1
        %s1089 = smul.addr %s1088, 16
        %s1090 = scalar_lea.vmem [#allocation10], %s1089
        %s1091 = sand.u32 %s33, 1
        %s1092 = scalar_lea.sflag [#allocation12], %s1091
        %s1093 = sand.u32 %s171, 1
        %s1094 = smul.addr %s1093, 2
        %s1095 = scalar_lea.vmem [#allocation11], %s1094
        %s1096 = sand.u32 %s33, 1
        %s1097 = scalar_lea.sflag [#allocation12], %s1096
        %s1098 = sand.u32 %s197, 1
        %s1099 = smul.addr %s1098, 2
        %s1100 = scalar_lea.vmem [#allocation13], %s1099
        // Predicated region
        $region53: #{tpu_custom_call.1} parent=35 // pred_check
          %p1101 = pneg %p155
        $region54: #{tpu_custom_call.1} parent=35 // pred_check_branch
          %1103 = sbr.rel (%p1101) target = $region56
        $region55: #{tpu_custom_call.1} parent=35 // pred_region
          %1105 = vsyncadd %s1087, 0
          %s1106 = smul.addr %s33, 8
          %s1107 = smul.addr %s1106, 2
          %s1108 = scalar_lea.hbm %s4, %s1107
          %s1109 = sshll.u32 %s1090, 4
          %s1110 = int_to_ptr.vmem [resolvable:$true] %s1109
          %s1111 = sshll.u32 %s1108, 4
          %s1112 = int_to_ptr.hbm [resolvable:$true] %s1111
          %1117 = dma.vmem_to_hbm [thread:$0]  %s1110, 256, %s1112, %s1087, 32, 32, 2
        $region56: #{tpu_custom_call.1} parent=35 // pred_fallthru
          _
        // Predicated region
        $region57: #{tpu_custom_call.1} parent=35 // pred_check
          %p1118 = pneg %p181
        $region58: #{tpu_custom_call.1} parent=35 // pred_check_branch
          %1120 = sbr.rel (%p1118) target = $region60
        $region59: #{tpu_custom_call.1} parent=35 // pred_region
          %1122 = vsyncadd %s1092, 0
          %s1123 = smul.addr %s33, 2
          %s1124 = scalar_lea.hbm %s5, %s1123
          %s1126 = sshll.u32 %s1095, 4
          %s1127 = int_to_ptr.vmem [resolvable:$true] %s1126
          %s1128 = sshll.u32 %s1124, 4
          %s1129 = int_to_ptr.hbm [resolvable:$true] %s1128
          %1131 = dma.vmem_to_hbm [thread:$0]  %s1127, 32, %s1129, %s1092
        $region60: #{tpu_custom_call.1} parent=35 // pred_fallthru
          _
        // Predicated region
        $region61: #{tpu_custom_call.1} parent=35 // pred_check
          %p1132 = pneg %p207
        $region62: #{tpu_custom_call.1} parent=35 // pred_check_branch
          %1134 = sbr.rel (%p1132) target = $region64
        $region63: #{tpu_custom_call.1} parent=35 // pred_region
          %1136 = vsyncadd %s1097, 0
          %s1137 = smul.addr %s33, 2
          %s1138 = scalar_lea.hbm %s6, %s1137
          %s1140 = sshll.u32 %s1100, 4
          %s1141 = int_to_ptr.vmem [resolvable:$true] %s1140
          %s1142 = sshll.u32 %s1138, 4
          %s1143 = int_to_ptr.hbm [resolvable:$true] %s1142
          %1145 = dma.vmem_to_hbm [thread:$0]  %s1141, 32, %s1143, %s1097
        $region64: #{tpu_custom_call.1} parent=35 // pred_fallthru
          _
      $region36: #{tpu_custom_call.1} parent=5 // pred_fallthru
        _
      %p1146 = scmp.le.s32.totalorder 2, %s28
      // Predicated region
      $region65: #{tpu_custom_call.1} parent=5 // pred_check
        %p1147 = pneg %p1146
      $region66: #{tpu_custom_call.1} parent=5 // pred_check_branch
        %1149 = sbr.rel (%p1147) target = $region68
      $region67: #{tpu_custom_call.1} parent=5 // pred_region
        %s1150 = ssub.s32 %s28, 2
        // Predicated region
        $region69: #{tpu_custom_call.1} parent=67 // pred_check
          %p1151 = pneg %p161
        $region70: #{tpu_custom_call.1} parent=67 // pred_check_branch
          %1153 = sbr.rel (%p1151) target = $region72
        $region71: #{tpu_custom_call.1} parent=67 // pred_region
          %s1154 = sand.u32 %s146, 1
          %s1155 = scalar_lea.sflag [#allocation4], %s1154
          %s1156 = sand.u32 %s146, 1
          %s1157 = smul.addr %s1156, 16
          %s1158 = scalar_lea.vmem [#allocation10], %s1157
          %1160 = dma.done %s1155, 256
        $region72: #{tpu_custom_call.1} parent=67 // pred_fallthru
          _
        // Predicated region
        $region73: #{tpu_custom_call.1} parent=67 // pred_check
          %p1161 = pneg %p187
        $region74: #{tpu_custom_call.1} parent=67 // pred_check_branch
          %1163 = sbr.rel (%p1161) target = $region76
        $region75: #{tpu_custom_call.1} parent=67 // pred_region
          %s1164 = sand.u32 %s34, 1
          %s1165 = scalar_lea.sflag [#allocation12], %s1164
          %s1166 = sand.u32 %s172, 1
          %s1167 = smul.addr %s1166, 2
          %s1168 = scalar_lea.vmem [#allocation11], %s1167
          %1170 = dma.done %s1165, 32
        $region76: #{tpu_custom_call.1} parent=67 // pred_fallthru
          _
        // Predicated region
        $region77: #{tpu_custom_call.1} parent=67 // pred_check
          %p1171 = pneg %p213
        $region78: #{tpu_custom_call.1} parent=67 // pred_check_branch
          %1173 = sbr.rel (%p1171) target = $region80
        $region79: #{tpu_custom_call.1} parent=67 // pred_region
          %s1174 = sand.u32 %s34, 1
          %s1175 = scalar_lea.sflag [#allocation12], %s1174
          %s1176 = sand.u32 %s198, 1
          %s1177 = smul.addr %s1176, 2
          %s1178 = scalar_lea.vmem [#allocation13], %s1177
          %1180 = dma.done %s1175, 32
        $region80: #{tpu_custom_call.1} parent=67 // pred_fallthru
          _
      $region68: #{tpu_custom_call.1} parent=5 // pred_fallthru
        _
    $region6: #{tpu_custom_call.1} parent=1 // loop_footer
      %s32 = sadd.s32 1, %s28
    $region7: #{tpu_custom_call.1} parent=1 // loop_footer_branch
      %27 = sbr.rel target = $region3
    $region8: #{tpu_custom_call.1} parent=1 // loop_exit
      _
    %1181 = vsyncpa [#allocation3], 1
    %s1182 = scalar_lea.sflag [#allocation3], 1
    %1183 = vsyncpa %s1182, 1
    %1184 = vsyncpa [#allocation6], 1
    %s1185 = scalar_lea.sflag [#allocation6], 1
    %1186 = vsyncpa %s1185, 1
    %1187 = vsyncpa [#allocation9], 1
    %s1188 = scalar_lea.sflag [#allocation9], 1
    %1189 = vsyncpa %s1188, 1
    %1190 = vsyncpa [#allocation4], 1
    %s1191 = scalar_lea.sflag [#allocation4], 1
    %1192 = vsyncpa %s1191, 1
    %1193 = vsyncpa [#allocation12], 1
    %s1194 = scalar_lea.sflag [#allocation12], 1
    %1195 = vsyncpa %s1194, 1

</llo_original>
